<compile_context>
chip_gen: v6e
topology: v6e:2x2x1
jax: 0.10.0
libtpu: 0.0.40
codegen_flags: <defaults>
</compile_context>

<pallas_src>
import functools

import jax
import jax.numpy as jnp
from jax.experimental import pallas as pl
from jax.experimental.pallas import tpu as pltpu


ACT_DTYPE = jnp.bfloat16                 # matmul-operand dtype (MXU-native)
_VMEM_CAP = 64 * 1024 * 1024             # v7x physical VMEM; safe everywhere


# ------------------------------ small helpers ------------------------------- #

def _row_tile(m, target):
    """Largest multiple-of-8 divisor of m that is <= target (else m itself)."""
    if m <= target or m % 8 != 0:
        return m
    t = (target // 8) * 8
    while m % t != 0:
        t -= 8
    return t


def _lane_tile(k, target):
    """Largest multiple-of-128 divisor of k that is <= target (else k itself)."""
    if k <= target or k % 128 != 0:
        return k
    t = (target // 128) * 128
    while k % t != 0:
        t -= 128
    return t


def _bytes(shape, dtype):
    n = 1
    for s in shape:
        n *= int(s)
    return n * jnp.dtype(dtype).itemsize


def _vmem_limit(nbytes, headroom=1.3):
    return int(max(min(nbytes * headroom, _VMEM_CAP), 4 * 1024 * 1024))


# ----------------------------- tiled linear (x @ W + b) --------------------- #

def _linear_resident_kernel(x_ref, w_ref, b_ref, o_ref):
    acc = jnp.dot(x_ref[...], w_ref[...], preferred_element_type=jnp.float32)
    o_ref[...] = (acc + b_ref[...]).astype(o_ref.dtype)


def _linear_ktiled_kernel(x_ref, w_ref, b_ref, o_ref, acc_ref):
    @pl.when(pl.program_id(1) == 0)
    def _():
        acc_ref[...] = jnp.zeros_like(acc_ref)

    acc_ref[...] += jnp.dot(x_ref[...], w_ref[...],
                            preferred_element_type=jnp.float32)

    @pl.when(pl.program_id(1) == pl.num_programs(1) - 1)
    def _():
        o_ref[...] = (acc_ref[...] + b_ref[...]).astype(o_ref.dtype)


def linear(x2d, w, b, *, tm=256, tk=512, resident_weight_bytes=8 * 1024 * 1024):
    """y = x2d @ w + b.  Weight-resident when the weight fits, else K-tiled."""
    M, K = x2d.shape
    Nout = w.shape[1]
    w_bytes = _bytes((K, Nout), w.dtype)
    cost = pl.CostEstimate(
        flops=2 * M * K * Nout,
        transcendentals=0,
        bytes_accessed=_bytes((M, K), x2d.dtype) + w_bytes
                       + _bytes((M, Nout), x2d.dtype) + _bytes((Nout,), b.dtype))

    if w_bytes <= resident_weight_bytes:
        # Weight fetched from HBM exactly once (constant index_map, single
        # buffer) -- no re-streaming per row tile.
        TM = _row_tile(M, tm)
        vmem = _vmem_limit(2 * _bytes((TM, K), x2d.dtype)
                           + w_bytes + _bytes((1, Nout), b.dtype)
                           + 2 * _bytes((TM, Nout), x2d.dtype))
        return pl.pallas_call(
            _linear_resident_kernel,
            out_shape=jax.ShapeDtypeStruct((M, Nout), x2d.dtype),
            grid=(M // TM,),
            in_specs=[
                pl.BlockSpec((TM, K), lambda i: (i, 0)),
                pl.BlockSpec((K, Nout), lambda i: (0, 0),
                             pipeline_mode=pl.Buffered(1)),
                pl.BlockSpec((1, Nout), lambda i: (0, 0),
                             pipeline_mode=pl.Buffered(1)),
            ],
            out_specs=pl.BlockSpec((TM, Nout), lambda i: (i, 0)),
            compiler_params=pltpu.CompilerParams(
                dimension_semantics=("parallel",),
                vmem_limit_bytes=vmem),
            cost_estimate=cost,
        )(x2d, w, b.reshape(1, Nout))

    # Large weight: stream K slabs with an f32 accumulator.  Bigger row tiles
    # amortize weight re-streaming (v5e is HBM-bound) and per-step overhead.
    TM = _row_tile(M, 512)
    TK = _lane_tile(K, tk)
    vmem = _vmem_limit(2 * _bytes((TM, TK), x2d.dtype)
                       + 2 * _bytes((TK, Nout), w.dtype)
                       + _bytes((1, Nout), b.dtype)
                       + 2 * _bytes((TM, Nout), x2d.dtype)
                       + _bytes((TM, Nout), jnp.float32))
    return pl.pallas_call(
        _linear_ktiled_kernel,
        out_shape=jax.ShapeDtypeStruct((M, Nout), x2d.dtype),
        grid=(M // TM, K // TK),
        in_specs=[
            pl.BlockSpec((TM, TK), lambda i, k: (i, k)),
            pl.BlockSpec((TK, Nout), lambda i, k: (k, 0)),
            pl.BlockSpec((1, Nout), lambda i, k: (0, 0),
                         pipeline_mode=pl.Buffered(1)),
        ],
        out_specs=pl.BlockSpec((TM, Nout), lambda i, k: (i, 0)),
        scratch_shapes=[pltpu.VMEM((TM, Nout), jnp.float32)],
        compiler_params=pltpu.CompilerParams(
            dimension_semantics=("parallel", "arbitrary"),
            vmem_limit_bytes=vmem),
        cost_estimate=cost,
    )(x2d, w, b.reshape(1, Nout))


# ------------------- self-attention core (heads inside kernel) -------------- #

def _attn_kernel(qkv_ref, o_ref, *, d_model, num_heads, d_k):
    # qkv_ref block: (1, S, 3*d_model) bf16; lanes are [Q | K | V].
    # Heads are sliced straight off the ref and each head's output is stored
    # into its own lane window of o_ref: no full-slab live value, no concat
    # epilogue, per-head live ranges die immediately after the store.
    for h in range(num_heads):                          # static unroll
        lo = h * d_k
        qh = qkv_ref[0, :, lo:lo + d_k]                                 # (S, d_k)
        kh = qkv_ref[0, :, d_model + lo:d_model + lo + d_k]             # (S, d_k)
        vh = qkv_ref[0, :, 2 * d_model + lo:2 * d_model + lo + d_k]     # (S, d_k)
        # 1/sqrt(d_k) is folded into W_q / b_q at init time; contract the
        # minor (d_k) axis of both operands (no explicit k.T).
        s = jax.lax.dot_general(qh, kh, (((1,), (1,)), ((), ())),
                                preferred_element_type=jnp.float32)
        s = s - jnp.max(s, axis=-1, keepdims=True)      # stable softmax (f32)
        p = jnp.exp(s)
        p = p * pl.reciprocal(jnp.sum(p, axis=-1, keepdims=True), approx=True)
        oh = jnp.dot(p.astype(vh.dtype), vh, preferred_element_type=jnp.float32)
        o_ref[0, :, lo:lo + d_k] = oh.astype(o_ref.dtype)
    # TODO(synk): for long S (or d_k >= 128) switch to a flash/online-softmax
    # pattern gridded over (batch, head, kv-tiles) with m/l/acc scratch instead
    # of full SxS scores, and keep per-call MXU shapes >= 256 by batching heads.


def attention(qkv, d_model, num_heads):
    # qkv: [N, S, 3*d_model] (bf16)
    N, S, threeD = qkv.shape
    d_k = d_model // num_heads
    cost = pl.CostEstimate(
        flops=4 * N * num_heads * S * S * d_k,
        transcendentals=N * num_heads * S * S,
        bytes_accessed=_bytes(qkv.shape, qkv.dtype)
                       + _bytes((N, S, d_model), qkv.dtype))
    vmem = _vmem_limit(2 * _bytes((1, S, threeD), qkv.dtype)
                       + 2 * _bytes((1, S, d_model), qkv.dtype)
                       + 2 * _bytes((S, S), jnp.float32))
    return pl.pallas_call(
        functools.partial(_attn_kernel, d_model=d_model, num_heads=num_heads,
                          d_k=d_k),
        out_shape=jax.ShapeDtypeStruct((N, S, d_model), qkv.dtype),
        grid=(N,),
        in_specs=[pl.BlockSpec((1, S, threeD), lambda n: (n, 0, 0))],
        out_specs=pl.BlockSpec((1, S, d_model), lambda n: (n, 0, 0)),
        compiler_params=pltpu.CompilerParams(
            dimension_semantics=("parallel",),
            vmem_limit_bytes=vmem),
        cost_estimate=cost,
    )(qkv)


# ----------- matmul (K-tiled) + bias + residual + LayerNorm (fused) --------- #

def _mm_res_ln_kernel(x_ref, w_ref, b_ref, r_ref, g_ref, be_ref, o_ref,
                      acc_ref, *, eps):
    kj = pl.program_id(1)

    @pl.when(kj == 0)
    def _():
        acc_ref[...] = jnp.zeros_like(acc_ref)

    acc_ref[...] += jnp.dot(x_ref[...], w_ref[...],
                            preferred_element_type=jnp.float32)

    @pl.when(kj == pl.num_programs(1) - 1)
    def _():
        y = acc_ref[...] + b_ref[...] + r_ref[...].astype(jnp.float32)
        mean = jnp.mean(y, axis=-1, keepdims=True)
        var = jnp.mean(jnp.square(y - mean), axis=-1, keepdims=True)
        o_ref[...] = ((y - mean) * jax.lax.rsqrt(var + eps) * g_ref[...]
                      + be_ref[...]).astype(o_ref.dtype)


def matmul_residual_layernorm(x2d, w, b, res2d, gamma, beta, *,
                              tm=256, tk=512, eps=1e-5):
    M, K = x2d.shape
    D = w.shape[1]
    TM = _row_tile(M, tm)
    TK = _lane_tile(K, tk)
    cost = pl.CostEstimate(
        flops=2 * M * K * D,
        transcendentals=0,
        bytes_accessed=_bytes((M, K), x2d.dtype) + _bytes((K, D), w.dtype)
                       + _bytes((M, D), res2d.dtype) + _bytes((M, D), x2d.dtype))
    vmem = _vmem_limit(2 * _bytes((TM, TK), x2d.dtype)
                       + 2 * _bytes((TK, D), w.dtype)
                       + 2 * _bytes((TM, D), res2d.dtype)
                       + 3 * _bytes((1, D), jnp.float32)
                       + 2 * _bytes((TM, D), x2d.dtype)
                       + _bytes((TM, D), jnp.float32))
    return pl.pallas_call(
        functools.partial(_mm_res_ln_kernel, eps=eps),
        out_shape=jax.ShapeDtypeStruct((M, D), x2d.dtype),
        grid=(M // TM, K // TK),
        in_specs=[
            pl.BlockSpec((TM, TK), lambda i, k: (i, k)),
            pl.BlockSpec((TK, D), lambda i, k: (k, 0)),
            pl.BlockSpec((1, D), lambda i, k: (0, 0),
                         pipeline_mode=pl.Buffered(1)),
            pl.BlockSpec((TM, D), lambda i, k: (i, 0)),
            pl.BlockSpec((1, D), lambda i, k: (0, 0),
                         pipeline_mode=pl.Buffered(1)),
            pl.BlockSpec((1, D), lambda i, k: (0, 0),
                         pipeline_mode=pl.Buffered(1)),
        ],
        out_specs=pl.BlockSpec((TM, D), lambda i, k: (i, 0)),
        scratch_shapes=[pltpu.VMEM((TM, D), jnp.float32)],
        compiler_params=pltpu.CompilerParams(
            dimension_semantics=("parallel", "arbitrary"),
            vmem_limit_bytes=vmem),
        cost_estimate=cost,
    )(x2d, w, b.reshape(1, D), res2d, gamma.reshape(1, D), beta.reshape(1, D))


# --------- FFN (Linear->ReLU->Linear), H-tiled, + residual + LN (fused) ------ #

def _ffn_res_ln_kernel(x_ref, w1_ref, b1_ref, w2_ref, b2_ref, g_ref, be_ref,
                       o_ref, acc_ref, *, eps):
    hj = pl.program_id(1)

    @pl.when(hj == 0)
    def _():
        acc_ref[...] = jnp.zeros_like(acc_ref)

    x = x_ref[...]
    hid = jnp.dot(x, w1_ref[...], preferred_element_type=jnp.float32) + b1_ref[...]
    hid = jnp.maximum(hid, 0.0)                        # ReLU per H-chunk (exact)
    acc_ref[...] += jnp.dot(hid.astype(x.dtype), w2_ref[...],
                            preferred_element_type=jnp.float32)

    @pl.when(hj == pl.num_programs(1) - 1)
    def _():
        y = acc_ref[...] + b2_ref[...] + x.astype(jnp.float32)   # bias + residual
        mean = jnp.mean(y, axis=-1, keepdims=True)
        var = jnp.mean(jnp.square(y - mean), axis=-1, keepdims=True)
        o_ref[...] = ((y - mean) * jax.lax.rsqrt(var + eps) * g_ref[...]
                      + be_ref[...]).astype(o_ref.dtype)


def ffn_residual_layernorm(x2d, w1, b1, w2, b2, gamma, beta, *,
                           tm=128, th=512, eps=1e-5):
    M, D = x2d.shape
    H = w1.shape[1]
    TM = _row_tile(M, tm)          # tm=128 keeps the kernel under v7x's budget
    TH = _lane_tile(H, th)         # hidden dim streamed as a reduction axis
    cost = pl.CostEstimate(
        flops=4 * M * D * H,
        transcendentals=0,
        bytes_accessed=_bytes((M, D), x2d.dtype) + _bytes((D, H), w1.dtype)
                       + _bytes((H, D), w2.dtype) + _bytes((M, D), x2d.dtype))
    vmem = _vmem_limit(2 * _bytes((TM, D), x2d.dtype)
                       + 2 * _bytes((D, TH), w1.dtype)
                       + 2 * _bytes((1, TH), jnp.float32)
                       + 2 * _bytes((TH, D), w2.dtype)
                       + 3 * _bytes((1, D), jnp.float32)
                       + 2 * _bytes((TM, D), x2d.dtype)
                       + _bytes((TM, D), jnp.float32)
                       + _bytes((TM, TH), jnp.float32))
    return pl.pallas_call(
        functools.partial(_ffn_res_ln_kernel, eps=eps),
        out_shape=jax.ShapeDtypeStruct((M, D), x2d.dtype),
        grid=(M // TM, H // TH),
        in_specs=[
            pl.BlockSpec((TM, D), lambda i, h: (i, 0)),
            pl.BlockSpec((D, TH), lambda i, h: (0, h)),
            pl.BlockSpec((1, TH), lambda i, h: (0, h)),
            pl.BlockSpec((TH, D), lambda i, h: (h, 0)),
            pl.BlockSpec((1, D), lambda i, h: (0, 0),
                         pipeline_mode=pl.Buffered(1)),
            pl.BlockSpec((1, D), lambda i, h: (0, 0),
                         pipeline_mode=pl.Buffered(1)),
            pl.BlockSpec((1, D), lambda i, h: (0, 0),
                         pipeline_mode=pl.Buffered(1)),
        ],
        out_specs=pl.BlockSpec((TM, D), lambda i, h: (i, 0)),
        scratch_shapes=[pltpu.VMEM((TM, D), jnp.float32)],
        compiler_params=pltpu.CompilerParams(
            dimension_semantics=("parallel", "arbitrary"),
            vmem_limit_bytes=vmem),
        cost_estimate=cost,
    )(x2d, w1, b1.reshape(1, H), w2, b2.reshape(1, D),
      gamma.reshape(1, D), beta.reshape(1, D))


# --------------------------------- parameters -------------------------------- #

def init_linear(key, fan_in, fan_out, scale=1.0):
    # mirror PyTorch nn.Linear default init (uniform +-1/sqrt(fan_in));
    # weight stored as [in, out] in bf16 (MXU-native); bias stays f32.
    # `scale` lets us fold the attention 1/sqrt(d_k) into W_q/b_q at init time.
    kw, kb = jax.random.split(key)
    bound = 1.0 / float(fan_in) ** 0.5
    w = jax.random.uniform(kw, (fan_in, fan_out), jnp.float32, -bound, bound)
    b = jax.random.uniform(kb, (fan_out,), jnp.float32, -bound, bound)
    return (w * scale).astype(ACT_DTYPE), (b * scale).astype(jnp.float32)


def init_params(key, input_dim, d_model, num_layers, num_heads):
    d_k = d_model // num_heads
    q_scale = 1.0 / float(d_k) ** 0.5          # folded into W_q / b_q
    params = {}
    key, ke = jax.random.split(key)
    params["embed"] = init_linear(ke, input_dim, d_model)
    layers = []
    for _ in range(num_layers):
        key, kq, kk, kv, ko, k1, k2 = jax.random.split(key, 7)
        wq, bq = init_linear(kq, d_model, d_model, scale=q_scale)
        wk, bk = init_linear(kk, d_model, d_model)
        wv, bv = init_linear(kv, d_model, d_model)
        layers.append({
            # fused QKV projection: one [D, 3D] matmul per layer
            "w_qkv": jnp.concatenate([wq, wk, wv], axis=1),
            "b_qkv": jnp.concatenate([bq, bk, bv]),
            "fc_out": init_linear(ko, d_model, d_model),
            "norm1": (jnp.ones((d_model,), jnp.float32),
                      jnp.zeros((d_model,), jnp.float32)),
            "norm2": (jnp.ones((d_model,), jnp.float32),
                      jnp.zeros((d_model,), jnp.float32)),
            "ff1": init_linear(k1, d_model, 4 * d_model),
            "ff2": init_linear(k2, 4 * d_model, d_model),
        })
    params["layers"] = layers
    return params


# -------------------------------- forward pass ------------------------------- #

def transformer_encoder(x, params, num_heads):
    N, S, input_dim = x.shape
    w_e, b_e = params["embed"]
    d_model = w_e.shape[1]

    h = linear(x.reshape(N * S, input_dim).astype(ACT_DTYPE), w_e, b_e)  # [M, D]
    for layer in params["layers"]:
        x2d = h                                                  # [N*S, D] bf16
        qkv = linear(x2d, layer["w_qkv"], layer["b_qkv"])        # [N*S, 3D]
        attn = attention(qkv.reshape(N, S, 3 * d_model),
                         d_model, num_heads)                     # [N, S, D]
        # fc_out + residual + LayerNorm fused into one kernel (K-tiled)
        h1 = matmul_residual_layernorm(attn.reshape(N * S, d_model),
                                       *layer["fc_out"], x2d, *layer["norm1"])
        # FFN + residual + LayerNorm fused into one kernel (H-tiled)
        h = ffn_residual_layernorm(h1, *layer["ff1"], *layer["ff2"],
                                   *layer["norm2"])
        # TODO(synk): nn.Dropout is identity in inference (eval) mode; omitted.
    return h.reshape(N, S, d_model).astype(jnp.float32)


# ------------------------------------ main ----------------------------------- #

if __name__ == "__main__":
    # small shapes consistent with the module's forward
    N, S, input_dim = 2, 8, 16
    d_model, num_layers, num_heads, dropout = 32, 2, 4, 0.1

    key = jax.random.PRNGKey(0)
    key, kx, kp = jax.random.split(key, 3)
    x = jax.random.normal(kx, (N, S, input_dim), jnp.float32)
    params = init_params(kp, input_dim, d_model, num_layers, num_heads)

    fwd = jax.jit(functools.partial(transformer_encoder, num_heads=num_heads))
    out = fwd(x, params)
    out = jax.block_until_ready(out)
    assert out.shape == (N, S, d_model)
    print("KERNEL_OK")
</pallas_src>

<mosaic_0001>
module attributes {stable_mosaic.version = 11 : i64} {
  func.func @_linear_resident_kernel(%arg0: i32, %arg1: memref<16x32xbf16, #tpu.memory_space<vmem>>, %arg2: memref<32x96xbf16, #tpu.memory_space<vmem>>, %arg3: memref<1x96xf32, #tpu.memory_space<vmem>>, %arg4: memref<16x96xbf16, #tpu.memory_space<vmem>>) attributes {dimension_semantics = [#tpu.dimension_semantics<parallel>], iteration_bounds = array<i64: 1>, scalar_prefetch = 0 : i64, scratch_operands = 0 : i64, tpu.core_type = #tpu.core_type<tc>, window_params = [{transform_indices = @transform_0, window_bounds = array<i64: 16, 32>}, {pipeline_mode = #tpu.pipeline_mode<synchronous>, transform_indices = @transform_1, window_bounds = array<i64: 32, 96>}, {pipeline_mode = #tpu.pipeline_mode<synchronous>, transform_indices = @transform_2, window_bounds = array<i64: 1, 96>}, {transform_indices = @transform_3, window_bounds = array<i64: 16, 96>}]} {
    %c0 = arith.constant 0 : index
    %c0_0 = arith.constant 0 : index
    %0 = vector.load %arg1[%c0, %c0_0] : memref<16x32xbf16, #tpu.memory_space<vmem>>, vector<16x32xbf16>
    %c0_1 = arith.constant 0 : index
    %c0_2 = arith.constant 0 : index
    %1 = vector.load %arg2[%c0_1, %c0_2] : memref<32x96xbf16, #tpu.memory_space<vmem>>, vector<32x96xbf16>
    %cst = arith.constant dense<0.000000e+00> : vector<16x96xf32>
    %2 = tpu.matmul %0, %1, %cst {dimension_numbers = #tpu.dot_dimension_numbers<[1], [0], [0], [1], [0, 0, 1, 1], [], []>} : vector<16x32xbf16>, vector<32x96xbf16>, vector<16x96xf32> -> vector<16x96xf32>
    %c0_3 = arith.constant 0 : index
    %c0_4 = arith.constant 0 : index
    %3 = vector.load %arg3[%c0_3, %c0_4] : memref<1x96xf32, #tpu.memory_space<vmem>>, vector<1x96xf32>
    %4 = vector.broadcast %3 : vector<1x96xf32> to vector<16x96xf32>
    %5 = arith.addf %2, %4 : vector<16x96xf32>
    %6 = arith.truncf %5 : vector<16x96xf32> to vector<16x96xbf16>
    %c0_5 = arith.constant 0 : index
    %c0_6 = arith.constant 0 : index
    %7 = vector.load %arg4[%c0_5, %c0_6] : memref<16x96xbf16, #tpu.memory_space<vmem>>, vector<16x96xbf16>
    tpu.vector_store %arg4[%c0_5, %c0_6], %6 {strides = array<i32>} : memref<16x96xbf16, #tpu.memory_space<vmem>>, vector<16x96xbf16>,
    return
  }
  func.func @transform_0(%arg0: i32) -> (i32, i32) {
    %c0_i32 = arith.constant 0 : i32
    %c0_i32_0 = arith.constant 0 : i32
    return %arg0, %c0_i32 : i32, i32
  }
  func.func @transform_1(%arg0: i32) -> (i32, i32) {
    %c0_i32 = arith.constant 0 : i32
    %c0_i32_0 = arith.constant 0 : i32
    %c0_i32_1 = arith.constant 0 : i32
    return %c0_i32, %c0_i32_0 : i32, i32
  }
  func.func @transform_2(%arg0: i32) -> (i32, i32) {
    %c0_i32 = arith.constant 0 : i32
    %c0_i32_0 = arith.constant 0 : i32
    %c0_i32_1 = arith.constant 0 : i32
    return %c0_i32, %c0_i32_0 : i32, i32
  }
  func.func @transform_3(%arg0: i32) -> (i32, i32) {
    %c0_i32 = arith.constant 0 : i32
    %c0_i32_0 = arith.constant 0 : i32
    return %arg0, %c0_i32 : i32, i32
  }
}

module attributes {stable_mosaic.version = 11 : i64} {
  func.func @_linear_resident_kernel(%arg0: i32, %arg1: memref<16x16xbf16, #tpu.memory_space<vmem>>, %arg2: memref<16x32xbf16, #tpu.memory_space<vmem>>, %arg3: memref<1x32xf32, #tpu.memory_space<vmem>>, %arg4: memref<16x32xbf16, #tpu.memory_space<vmem>>) attributes {dimension_semantics = [#tpu.dimension_semantics<parallel>], iteration_bounds = array<i64: 1>, scalar_prefetch = 0 : i64, scratch_operands = 0 : i64, tpu.core_type = #tpu.core_type<tc>, window_params = [{transform_indices = @transform_0, window_bounds = array<i64: 16, 16>}, {pipeline_mode = #tpu.pipeline_mode<synchronous>, transform_indices = @transform_1, window_bounds = array<i64: 16, 32>}, {pipeline_mode = #tpu.pipeline_mode<synchronous>, transform_indices = @transform_2, window_bounds = array<i64: 1, 32>}, {transform_indices = @transform_3, window_bounds = array<i64: 16, 32>}]} {
    %c0 = arith.constant 0 : index
    %c0_0 = arith.constant 0 : index
    %0 = vector.load %arg1[%c0, %c0_0] : memref<16x16xbf16, #tpu.memory_space<vmem>>, vector<16x16xbf16>
    %c0_1 = arith.constant 0 : index
    %c0_2 = arith.constant 0 : index
    %1 = vector.load %arg2[%c0_1, %c0_2] : memref<16x32xbf16, #tpu.memory_space<vmem>>, vector<16x32xbf16>
    %cst = arith.constant dense<0.000000e+00> : vector<16x32xf32>
    %2 = tpu.matmul %0, %1, %cst {dimension_numbers = #tpu.dot_dimension_numbers<[1], [0], [0], [1], [0, 0, 1, 1], [], []>} : vector<16x16xbf16>, vector<16x32xbf16>, vector<16x32xf32> -> vector<16x32xf32>
    %c0_3 = arith.constant 0 : index
    %c0_4 = arith.constant 0 : index
    %3 = vector.load %arg3[%c0_3, %c0_4] : memref<1x32xf32, #tpu.memory_space<vmem>>, vector<1x32xf32>
    %4 = vector.broadcast %3 : vector<1x32xf32> to vector<16x32xf32>
    %5 = arith.addf %2, %4 : vector<16x32xf32>
    %6 = arith.truncf %5 : vector<16x32xf32> to vector<16x32xbf16>
    %c0_5 = arith.constant 0 : index
    %c0_6 = arith.constant 0 : index
    %7 = vector.load %arg4[%c0_5, %c0_6] : memref<16x32xbf16, #tpu.memory_space<vmem>>, vector<16x32xbf16>
    tpu.vector_store %arg4[%c0_5, %c0_6], %6 {strides = array<i32>} : memref<16x32xbf16, #tpu.memory_space<vmem>>, vector<16x32xbf16>,
    return
  }
  func.func @transform_0(%arg0: i32) -> (i32, i32) {
    %c0_i32 = arith.constant 0 : i32
    %c0_i32_0 = arith.constant 0 : i32
    return %arg0, %c0_i32 : i32, i32
  }
  func.func @transform_1(%arg0: i32) -> (i32, i32) {
    %c0_i32 = arith.constant 0 : i32
    %c0_i32_0 = arith.constant 0 : i32
    %c0_i32_1 = arith.constant 0 : i32
    return %c0_i32, %c0_i32_0 : i32, i32
  }
  func.func @transform_2(%arg0: i32) -> (i32, i32) {
    %c0_i32 = arith.constant 0 : i32
    %c0_i32_0 = arith.constant 0 : i32
    %c0_i32_1 = arith.constant 0 : i32
    return %c0_i32, %c0_i32_0 : i32, i32
  }
  func.func @transform_3(%arg0: i32) -> (i32, i32) {
    %c0_i32 = arith.constant 0 : i32
    %c0_i32_0 = arith.constant 0 : i32
    return %arg0, %c0_i32 : i32, i32
  }
}

module attributes {stable_mosaic.version = 11 : i64} {
  func.func @_attn_kernel(%arg0: i32, %arg1: memref<1x8x96xbf16, #tpu.memory_space<vmem>>, %arg2: memref<1x8x32xbf16, #tpu.memory_space<vmem>>) attributes {dimension_semantics = [#tpu.dimension_semantics<parallel>], iteration_bounds = array<i64: 2>, scalar_prefetch = 0 : i64, scratch_operands = 0 : i64, tpu.core_type = #tpu.core_type<tc>, window_params = [{transform_indices = @transform_0, window_bounds = array<i64: 1, 8, 96>}, {transform_indices = @transform_1, window_bounds = array<i64: 1, 8, 32>}]} {
    %c0 = arith.constant 0 : index
    %c0_0 = arith.constant 0 : index
    %c0_1 = arith.constant 0 : index
    %0 = vector.load %arg1[%c0, %c0_0, %c0_1] : memref<1x8x96xbf16, #tpu.memory_space<vmem>>, vector<1x8x8xbf16>
    %1 = vector.shape_cast %0 : vector<1x8x8xbf16> to vector<8x8xbf16>
    %c0_2 = arith.constant 0 : index
    %c0_3 = arith.constant 0 : index
    %c32 = arith.constant 32 : index
    %2 = vector.load %arg1[%c0_2, %c0_3, %c32] : memref<1x8x96xbf16, #tpu.memory_space<vmem>>, vector<1x8x8xbf16>
    %3 = vector.shape_cast %2 : vector<1x8x8xbf16> to vector<8x8xbf16>
    %c0_4 = arith.constant 0 : index
    %c0_5 = arith.constant 0 : index
    %c64 = arith.constant 64 : index
    %4 = vector.load %arg1[%c0_4, %c0_5, %c64] : memref<1x8x96xbf16, #tpu.memory_space<vmem>>, vector<1x8x8xbf16>
    %5 = vector.shape_cast %4 : vector<1x8x8xbf16> to vector<8x8xbf16>
    %cst = arith.constant dense<0.000000e+00> : vector<8x8xf32>
    %6 = tpu.matmul %1, %3, %cst {dimension_numbers = #tpu.dot_dimension_numbers<[1], [1], [0], [0], [0, 0, 1, 0], [], []>} : vector<8x8xbf16>, vector<8x8xbf16>, vector<8x8xf32> -> vector<8x8xf32>
    %cst_6 = arith.constant dense<0xFF800000> : vector<8xf32>
    %7 = vector.multi_reduction <maximumf>, %6, %cst_6 [1] : vector<8x8xf32> to vector<8xf32>
    %8 = vector.shape_cast %7 : vector<8xf32> to vector<8x1xf32>
    %9 = vector.broadcast %8 : vector<8x1xf32> to vector<8x8xf32>
    %10 = arith.subf %6, %9 : vector<8x8xf32>
    %11 = math.exp %10 : vector<8x8xf32>
    %cst_7 = arith.constant dense<0.000000e+00> : vector<8xf32>
    %12 = vector.multi_reduction <add>, %11, %cst_7 [1] : vector<8x8xf32> to vector<8xf32>
    %13 = vector.shape_cast %12 : vector<8xf32> to vector<8x1xf32>
    %14 = tpu.reciprocal %13 {approx = true} : vector<8x1xf32> -> vector<8x1xf32>
    %15 = vector.broadcast %14 : vector<8x1xf32> to vector<8x8xf32>
    %16 = arith.mulf %11, %15 : vector<8x8xf32>
    %17 = arith.truncf %16 : vector<8x8xf32> to vector<8x8xbf16>
    %cst_8 = arith.constant dense<0.000000e+00> : vector<8x8xf32>
    %18 = tpu.matmul %17, %5, %cst_8 {dimension_numbers = #tpu.dot_dimension_numbers<[1], [0], [0], [1], [0, 0, 1, 1], [], []>} : vector<8x8xbf16>, vector<8x8xbf16>, vector<8x8xf32> -> vector<8x8xf32>
    %19 = arith.truncf %18 : vector<8x8xf32> to vector<8x8xbf16>
    %c0_9 = arith.constant 0 : index
    %c0_10 = arith.constant 0 : index
    %c0_11 = arith.constant 0 : index
    %20 = vector.load %arg2[%c0_9, %c0_10, %c0_11] : memref<1x8x32xbf16, #tpu.memory_space<vmem>>, vector<1x8x8xbf16>
    %21 = vector.shape_cast %20 : vector<1x8x8xbf16> to vector<8x8xbf16>
    %22 = vector.shape_cast %19 : vector<8x8xbf16> to vector<1x8x8xbf16>
    tpu.vector_store %arg2[%c0_9, %c0_10, %c0_11], %22 {strides = array<i32>} : memref<1x8x32xbf16, #tpu.memory_space<vmem>>, vector<1x8x8xbf16>,
    %c0_12 = arith.constant 0 : index
    %c0_13 = arith.constant 0 : index
    %c8 = arith.constant 8 : index
    %23 = vector.load %arg1[%c0_12, %c0_13, %c8] : memref<1x8x96xbf16, #tpu.memory_space<vmem>>, vector<1x8x8xbf16>
    %24 = vector.shape_cast %23 : vector<1x8x8xbf16> to vector<8x8xbf16>
    %c0_14 = arith.constant 0 : index
    %c0_15 = arith.constant 0 : index
    %c40 = arith.constant 40 : index
    %25 = vector.load %arg1[%c0_14, %c0_15, %c40] : memref<1x8x96xbf16, #tpu.memory_space<vmem>>, vector<1x8x8xbf16>
    %26 = vector.shape_cast %25 : vector<1x8x8xbf16> to vector<8x8xbf16>
    %c0_16 = arith.constant 0 : index
    %c0_17 = arith.constant 0 : index
    %c72 = arith.constant 72 : index
    %27 = vector.load %arg1[%c0_16, %c0_17, %c72] : memref<1x8x96xbf16, #tpu.memory_space<vmem>>, vector<1x8x8xbf16>
    %28 = vector.shape_cast %27 : vector<1x8x8xbf16> to vector<8x8xbf16>
    %cst_18 = arith.constant dense<0.000000e+00> : vector<8x8xf32>
    %29 = tpu.matmul %24, %26, %cst_18 {dimension_numbers = #tpu.dot_dimension_numbers<[1], [1], [0], [0], [0, 0, 1, 0], [], []>} : vector<8x8xbf16>, vector<8x8xbf16>, vector<8x8xf32> -> vector<8x8xf32>
    %cst_19 = arith.constant dense<0xFF800000> : vector<8xf32>
    %30 = vector.multi_reduction <maximumf>, %29, %cst_19 [1] : vector<8x8xf32> to vector<8xf32>
    %31 = vector.shape_cast %30 : vector<8xf32> to vector<8x1xf32>
    %32 = vector.broadcast %31 : vector<8x1xf32> to vector<8x8xf32>
    %33 = arith.subf %29, %32 : vector<8x8xf32>
    %34 = math.exp %33 : vector<8x8xf32>
    %cst_20 = arith.constant dense<0.000000e+00> : vector<8xf32>
    %35 = vector.multi_reduction <add>, %34, %cst_20 [1] : vector<8x8xf32> to vector<8xf32>
    %36 = vector.shape_cast %35 : vector<8xf32> to vector<8x1xf32>
    %37 = tpu.reciprocal %36 {approx = true} : vector<8x1xf32> -> vector<8x1xf32>
    %38 = vector.broadcast %37 : vector<8x1xf32> to vector<8x8xf32>
    %39 = arith.mulf %34, %38 : vector<8x8xf32>
    %40 = arith.truncf %39 : vector<8x8xf32> to vector<8x8xbf16>
    %cst_21 = arith.constant dense<0.000000e+00> : vector<8x8xf32>
    %41 = tpu.matmul %40, %28, %cst_21 {dimension_numbers = #tpu.dot_dimension_numbers<[1], [0], [0], [1], [0, 0, 1, 1], [], []>} : vector<8x8xbf16>, vector<8x8xbf16>, vector<8x8xf32> -> vector<8x8xf32>
    %42 = arith.truncf %41 : vector<8x8xf32> to vector<8x8xbf16>
    %c0_22 = arith.constant 0 : index
    %c0_23 = arith.constant 0 : index
    %c8_24 = arith.constant 8 : index
    %43 = vector.load %arg2[%c0_22, %c0_23, %c8_24] : memref<1x8x32xbf16, #tpu.memory_space<vmem>>, vector<1x8x8xbf16>
    %44 = vector.shape_cast %43 : vector<1x8x8xbf16> to vector<8x8xbf16>
    %45 = vector.shape_cast %42 : vector<8x8xbf16> to vector<1x8x8xbf16>
    tpu.vector_store %arg2[%c0_22, %c0_23, %c8_24], %45 {strides = array<i32>} : memref<1x8x32xbf16, #tpu.memory_space<vmem>>, vector<1x8x8xbf16>,
    %c0_25 = arith.constant 0 : index
    %c0_26 = arith.constant 0 : index
    %c16 = arith.constant 16 : index
    %46 = vector.load %arg1[%c0_25, %c0_26, %c16] : memref<1x8x96xbf16, #tpu.memory_space<vmem>>, vector<1x8x8xbf16>
    %47 = vector.shape_cast %46 : vector<1x8x8xbf16> to vector<8x8xbf16>
    %c0_27 = arith.constant 0 : index
    %c0_28 = arith.constant 0 : index
    %c48 = arith.constant 48 : index
    %48 = vector.load %arg1[%c0_27, %c0_28, %c48] : memref<1x8x96xbf16, #tpu.memory_space<vmem>>, vector<1x8x8xbf16>
    %49 = vector.shape_cast %48 : vector<1x8x8xbf16> to vector<8x8xbf16>
    %c0_29 = arith.constant 0 : index
    %c0_30 = arith.constant 0 : index
    %c80 = arith.constant 80 : index
    %50 = vector.load %arg1[%c0_29, %c0_30, %c80] : memref<1x8x96xbf16, #tpu.memory_space<vmem>>, vector<1x8x8xbf16>
    %51 = vector.shape_cast %50 : vector<1x8x8xbf16> to vector<8x8xbf16>
    %cst_31 = arith.constant dense<0.000000e+00> : vector<8x8xf32>
    %52 = tpu.matmul %47, %49, %cst_31 {dimension_numbers = #tpu.dot_dimension_numbers<[1], [1], [0], [0], [0, 0, 1, 0], [], []>} : vector<8x8xbf16>, vector<8x8xbf16>, vector<8x8xf32> -> vector<8x8xf32>
    %cst_32 = arith.constant dense<0xFF800000> : vector<8xf32>
    %53 = vector.multi_reduction <maximumf>, %52, %cst_32 [1] : vector<8x8xf32> to vector<8xf32>
    %54 = vector.shape_cast %53 : vector<8xf32> to vector<8x1xf32>
    %55 = vector.broadcast %54 : vector<8x1xf32> to vector<8x8xf32>
    %56 = arith.subf %52, %55 : vector<8x8xf32>
    %57 = math.exp %56 : vector<8x8xf32>
    %cst_33 = arith.constant dense<0.000000e+00> : vector<8xf32>
    %58 = vector.multi_reduction <add>, %57, %cst_33 [1] : vector<8x8xf32> to vector<8xf32>
    %59 = vector.shape_cast %58 : vector<8xf32> to vector<8x1xf32>
    %60 = tpu.reciprocal %59 {approx = true} : vector<8x1xf32> -> vector<8x1xf32>
    %61 = vector.broadcast %60 : vector<8x1xf32> to vector<8x8xf32>
    %62 = arith.mulf %57, %61 : vector<8x8xf32>
    %63 = arith.truncf %62 : vector<8x8xf32> to vector<8x8xbf16>
    %cst_34 = arith.constant dense<0.000000e+00> : vector<8x8xf32>
    %64 = tpu.matmul %63, %51, %cst_34 {dimension_numbers = #tpu.dot_dimension_numbers<[1], [0], [0], [1], [0, 0, 1, 1], [], []>} : vector<8x8xbf16>, vector<8x8xbf16>, vector<8x8xf32> -> vector<8x8xf32>
    %65 = arith.truncf %64 : vector<8x8xf32> to vector<8x8xbf16>
    %c0_35 = arith.constant 0 : index
    %c0_36 = arith.constant 0 : index
    %c16_37 = arith.constant 16 : index
    %66 = vector.load %arg2[%c0_35, %c0_36, %c16_37] : memref<1x8x32xbf16, #tpu.memory_space<vmem>>, vector<1x8x8xbf16>
    %67 = vector.shape_cast %66 : vector<1x8x8xbf16> to vector<8x8xbf16>
    %68 = vector.shape_cast %65 : vector<8x8xbf16> to vector<1x8x8xbf16>
    tpu.vector_store %arg2[%c0_35, %c0_36, %c16_37], %68 {strides = array<i32>} : memref<1x8x32xbf16, #tpu.memory_space<vmem>>, vector<1x8x8xbf16>,
    %c0_38 = arith.constant 0 : index
    %c0_39 = arith.constant 0 : index
    %c24 = arith.constant 24 : index
    %69 = vector.load %arg1[%c0_38, %c0_39, %c24] : memref<1x8x96xbf16, #tpu.memory_space<vmem>>, vector<1x8x8xbf16>
    %70 = vector.shape_cast %69 : vector<1x8x8xbf16> to vector<8x8xbf16>
    %c0_40 = arith.constant 0 : index
    %c0_41 = arith.constant 0 : index
    %c56 = arith.constant 56 : index
    %71 = vector.load %arg1[%c0_40, %c0_41, %c56] : memref<1x8x96xbf16, #tpu.memory_space<vmem>>, vector<1x8x8xbf16>
    %72 = vector.shape_cast %71 : vector<1x8x8xbf16> to vector<8x8xbf16>
    %c0_42 = arith.constant 0 : index
    %c0_43 = arith.constant 0 : index
    %c88 = arith.constant 88 : index
    %73 = vector.load %arg1[%c0_42, %c0_43, %c88] : memref<1x8x96xbf16, #tpu.memory_space<vmem>>, vector<1x8x8xbf16>
    %74 = vector.shape_cast %73 : vector<1x8x8xbf16> to vector<8x8xbf16>
    %cst_44 = arith.constant dense<0.000000e+00> : vector<8x8xf32>
    %75 = tpu.matmul %70, %72, %cst_44 {dimension_numbers = #tpu.dot_dimension_numbers<[1], [1], [0], [0], [0, 0, 1, 0], [], []>} : vector<8x8xbf16>, vector<8x8xbf16>, vector<8x8xf32> -> vector<8x8xf32>
    %cst_45 = arith.constant dense<0xFF800000> : vector<8xf32>
    %76 = vector.multi_reduction <maximumf>, %75, %cst_45 [1] : vector<8x8xf32> to vector<8xf32>
    %77 = vector.shape_cast %76 : vector<8xf32> to vector<8x1xf32>
    %78 = vector.broadcast %77 : vector<8x1xf32> to vector<8x8xf32>
    %79 = arith.subf %75, %78 : vector<8x8xf32>
    %80 = math.exp %79 : vector<8x8xf32>
    %cst_46 = arith.constant dense<0.000000e+00> : vector<8xf32>
    %81 = vector.multi_reduction <add>, %80, %cst_46 [1] : vector<8x8xf32> to vector<8xf32>
    %82 = vector.shape_cast %81 : vector<8xf32> to vector<8x1xf32>
    %83 = tpu.reciprocal %82 {approx = true} : vector<8x1xf32> -> vector<8x1xf32>
    %84 = vector.broadcast %83 : vector<8x1xf32> to vector<8x8xf32>
    %85 = arith.mulf %80, %84 : vector<8x8xf32>
    %86 = arith.truncf %85 : vector<8x8xf32> to vector<8x8xbf16>
    %cst_47 = arith.constant dense<0.000000e+00> : vector<8x8xf32>
    %87 = tpu.matmul %86, %74, %cst_47 {dimension_numbers = #tpu.dot_dimension_numbers<[1], [0], [0], [1], [0, 0, 1, 1], [], []>} : vector<8x8xbf16>, vector<8x8xbf16>, vector<8x8xf32> -> vector<8x8xf32>
    %88 = arith.truncf %87 : vector<8x8xf32> to vector<8x8xbf16>
    %c0_48 = arith.constant 0 : index
    %c0_49 = arith.constant 0 : index
    %c24_50 = arith.constant 24 : index
    %89 = vector.load %arg2[%c0_48, %c0_49, %c24_50] : memref<1x8x32xbf16, #tpu.memory_space<vmem>>, vector<1x8x8xbf16>
    %90 = vector.shape_cast %89 : vector<1x8x8xbf16> to vector<8x8xbf16>
    %91 = vector.shape_cast %88 : vector<8x8xbf16> to vector<1x8x8xbf16>
    tpu.vector_store %arg2[%c0_48, %c0_49, %c24_50], %91 {strides = array<i32>} : memref<1x8x32xbf16, #tpu.memory_space<vmem>>, vector<1x8x8xbf16>,
    return
  }
  func.func @transform_0(%arg0: i32) -> (i32, i32, i32) {
    %c0_i32 = arith.constant 0 : i32
    %c0_i32_0 = arith.constant 0 : i32
    %c0_i32_1 = arith.constant 0 : i32
    return %arg0, %c0_i32, %c0_i32_0 : i32, i32, i32
  }
  func.func @transform_1(%arg0: i32) -> (i32, i32, i32) {
    %c0_i32 = arith.constant 0 : i32
    %c0_i32_0 = arith.constant 0 : i32
    %c0_i32_1 = arith.constant 0 : i32
    return %arg0, %c0_i32, %c0_i32_0 : i32, i32, i32
  }
}

module attributes {stable_mosaic.version = 11 : i64} {
  func.func @_mm_res_ln_kernel(%arg0: i32, %arg1: i32, %arg2: memref<16x32xbf16, #tpu.memory_space<vmem>>, %arg3: memref<32x32xbf16, #tpu.memory_space<vmem>>, %arg4: memref<1x32xf32, #tpu.memory_space<vmem>>, %arg5: memref<16x32xbf16, #tpu.memory_space<vmem>>, %arg6: memref<1x32xf32, #tpu.memory_space<vmem>>, %arg7: memref<1x32xf32, #tpu.memory_space<vmem>>, %arg8: memref<16x32xbf16, #tpu.memory_space<vmem>>, %arg9: memref<16x32xf32, #tpu.memory_space<vmem>>) attributes {dimension_semantics = [#tpu.dimension_semantics<parallel>, #tpu.dimension_semantics<arbitrary>], iteration_bounds = array<i64: 1, 1>, scalar_prefetch = 0 : i64, scratch_operands = 1 : i64, tpu.core_type = #tpu.core_type<tc>, window_params = [{transform_indices = @transform_0, window_bounds = array<i64: 16, 32>}, {transform_indices = @transform_1, window_bounds = array<i64: 32, 32>}, {pipeline_mode = #tpu.pipeline_mode<synchronous>, transform_indices = @transform_2, window_bounds = array<i64: 1, 32>}, {transform_indices = @transform_3, window_bounds = array<i64: 16, 32>}, {pipeline_mode = #tpu.pipeline_mode<synchronous>, transform_indices = @transform_4, window_bounds = array<i64: 1, 32>}, {pipeline_mode = #tpu.pipeline_mode<synchronous>, transform_indices = @transform_5, window_bounds = array<i64: 1, 32>}, {transform_indices = @transform_6, window_bounds = array<i64: 16, 32>}]} {
    %c0_i32 = arith.constant 0 : i32
    %0 = arith.cmpi eq, %arg1, %c0_i32 : i32
    %1 = arith.extui %0 : i1 to i32
    %c0_i32_0 = arith.constant 0 : i32
    %2 = arith.cmpi ne, %1, %c0_i32_0 : i32
    scf.if %2 {
      %cst_10 = arith.constant 0.000000e+00 : f32
      %12 = vector.broadcast %cst_10 : f32 to vector<16x32xf32>
      %c0_11 = arith.constant 0 : index
      %c0_12 = arith.constant 0 : index
      %13 = vector.load %arg9[%c0_11, %c0_12] : memref<16x32xf32, #tpu.memory_space<vmem>>, vector<16x32xf32>
      tpu.vector_store %arg9[%c0_11, %c0_12], %12 {strides = array<i32>} : memref<16x32xf32, #tpu.memory_space<vmem>>, vector<16x32xf32>,
    } else {
    }
    %c0 = arith.constant 0 : index
    %c0_1 = arith.constant 0 : index
    %3 = vector.load %arg9[%c0, %c0_1] : memref<16x32xf32, #tpu.memory_space<vmem>>, vector<16x32xf32>
    %c0_2 = arith.constant 0 : index
    %c0_3 = arith.constant 0 : index
    %4 = vector.load %arg2[%c0_2, %c0_3] : memref<16x32xbf16, #tpu.memory_space<vmem>>, vector<16x32xbf16>
    %c0_4 = arith.constant 0 : index
    %c0_5 = arith.constant 0 : index
    %5 = vector.load %arg3[%c0_4, %c0_5] : memref<32x32xbf16, #tpu.memory_space<vmem>>, vector<32x32xbf16>
    %cst = arith.constant dense<0.000000e+00> : vector<16x32xf32>
    %6 = tpu.matmul %4, %5, %cst {dimension_numbers = #tpu.dot_dimension_numbers<[1], [0], [0], [1], [0, 0, 1, 1], [], []>} : vector<16x32xbf16>, vector<32x32xbf16>, vector<16x32xf32> -> vector<16x32xf32>
    %7 = arith.addf %3, %6 : vector<16x32xf32>
    %c0_6 = arith.constant 0 : index
    %c0_7 = arith.constant 0 : index
    %8 = vector.load %arg9[%c0_6, %c0_7] : memref<16x32xf32, #tpu.memory_space<vmem>>, vector<16x32xf32>
    tpu.vector_store %arg9[%c0_6, %c0_7], %7 {strides = array<i32>} : memref<16x32xf32, #tpu.memory_space<vmem>>, vector<16x32xf32>,
    %c0_i32_8 = arith.constant 0 : i32
    %9 = arith.cmpi eq, %arg1, %c0_i32_8 : i32
    %10 = arith.extui %9 : i1 to i32
    %c0_i32_9 = arith.constant 0 : i32
    %11 = arith.cmpi ne, %10, %c0_i32_9 : i32
    scf.if %11 {
      %c0_10 = arith.constant 0 : index
      %c0_11 = arith.constant 0 : index
      %12 = vector.load %arg9[%c0_10, %c0_11] : memref<16x32xf32, #tpu.memory_space<vmem>>, vector<16x32xf32>
      %c0_12 = arith.constant 0 : index
      %c0_13 = arith.constant 0 : index
      %13 = vector.load %arg4[%c0_12, %c0_13] : memref<1x32xf32, #tpu.memory_space<vmem>>, vector<1x32xf32>
      %14 = vector.broadcast %13 : vector<1x32xf32> to vector<16x32xf32>
      %15 = arith.addf %12, %14 : vector<16x32xf32>
      %c0_14 = arith.constant 0 : index
      %c0_15 = arith.constant 0 : index
      %16 = vector.load %arg5[%c0_14, %c0_15] : memref<16x32xbf16, #tpu.memory_space<vmem>>, vector<16x32xbf16>
      %17 = arith.extf %16 : vector<16x32xbf16> to vector<16x32xf32>
      %18 = arith.addf %15, %17 : vector<16x32xf32>
      %cst_16 = arith.constant dense<0.000000e+00> : vector<16xf32>
      %19 = vector.multi_reduction <add>, %18, %cst_16 [1] : vector<16x32xf32> to vector<16xf32>
      %20 = vector.shape_cast %19 : vector<16xf32> to vector<16x1xf32>
      %cst_17 = arith.constant 3.200000e+01 : f32
      %21 = vector.broadcast %cst_17 : f32 to vector<16x1xf32>
      %22 = arith.divf %20, %21 : vector<16x1xf32>
      %23 = vector.broadcast %22 : vector<16x1xf32> to vector<16x32xf32>
      %24 = arith.subf %18, %23 : vector<16x32xf32>
      %25 = arith.mulf %24, %24 : vector<16x32xf32>
      %cst_18 = arith.constant dense<0.000000e+00> : vector<16xf32>
      %26 = vector.multi_reduction <add>, %25, %cst_18 [1] : vector<16x32xf32> to vector<16xf32>
      %27 = vector.shape_cast %26 : vector<16xf32> to vector<16x1xf32>
      %cst_19 = arith.constant 3.200000e+01 : f32
      %28 = vector.broadcast %cst_19 : f32 to vector<16x1xf32>
      %29 = arith.divf %27, %28 : vector<16x1xf32>
      %30 = vector.broadcast %22 : vector<16x1xf32> to vector<16x32xf32>
      %31 = arith.subf %18, %30 : vector<16x32xf32>
      %cst_20 = arith.constant 9.99999974E-6 : f32
      %32 = vector.broadcast %cst_20 : f32 to vector<16x1xf32>
      %33 = arith.addf %29, %32 : vector<16x1xf32>
      %34 = math.rsqrt %33 : vector<16x1xf32>
      %35 = vector.broadcast %34 : vector<16x1xf32> to vector<16x32xf32>
      %36 = arith.mulf %31, %35 : vector<16x32xf32>
      %c0_21 = arith.constant 0 : index
      %c0_22 = arith.constant 0 : index
      %37 = vector.load %arg6[%c0_21, %c0_22] : memref<1x32xf32, #tpu.memory_space<vmem>>, vector<1x32xf32>
      %38 = vector.broadcast %37 : vector<1x32xf32> to vector<16x32xf32>
      %39 = arith.mulf %36, %38 : vector<16x32xf32>
      %c0_23 = arith.constant 0 : index
      %c0_24 = arith.constant 0 : index
      %40 = vector.load %arg7[%c0_23, %c0_24] : memref<1x32xf32, #tpu.memory_space<vmem>>, vector<1x32xf32>
      %41 = vector.broadcast %40 : vector<1x32xf32> to vector<16x32xf32>
      %42 = arith.addf %39, %41 : vector<16x32xf32>
      %43 = arith.truncf %42 : vector<16x32xf32> to vector<16x32xbf16>
      %c0_25 = arith.constant 0 : index
      %c0_26 = arith.constant 0 : index
      %44 = vector.load %arg8[%c0_25, %c0_26] : memref<16x32xbf16, #tpu.memory_space<vmem>>, vector<16x32xbf16>
      tpu.vector_store %arg8[%c0_25, %c0_26], %43 {strides = array<i32>} : memref<16x32xbf16, #tpu.memory_space<vmem>>, vector<16x32xbf16>,
    } else {
    }
    return
  }
  func.func @transform_0(%arg0: i32, %arg1: i32) -> (i32, i32) {
    %c0_i32 = arith.constant 0 : i32
    return %arg0, %arg1 : i32, i32
  }
  func.func @transform_1(%arg0: i32, %arg1: i32) -> (i32, i32) {
    %c0_i32 = arith.constant 0 : i32
    %c0_i32_0 = arith.constant 0 : i32
    return %arg1, %c0_i32 : i32, i32
  }
  func.func @transform_2(%arg0: i32, %arg1: i32) -> (i32, i32) {
    %c0_i32 = arith.constant 0 : i32
    %c0_i32_0 = arith.constant 0 : i32
    %c0_i32_1 = arith.constant 0 : i32
    return %c0_i32, %c0_i32_0 : i32, i32
  }
  func.func @transform_3(%arg0: i32, %arg1: i32) -> (i32, i32) {
    %c0_i32 = arith.constant 0 : i32
    %c0_i32_0 = arith.constant 0 : i32
    return %arg0, %c0_i32 : i32, i32
  }
  func.func @transform_4(%arg0: i32, %arg1: i32) -> (i32, i32) {
    %c0_i32 = arith.constant 0 : i32
    %c0_i32_0 = arith.constant 0 : i32
    %c0_i32_1 = arith.constant 0 : i32
    return %c0_i32, %c0_i32_0 : i32, i32
  }
  func.func @transform_5(%arg0: i32, %arg1: i32) -> (i32, i32) {
    %c0_i32 = arith.constant 0 : i32
    %c0_i32_0 = arith.constant 0 : i32
    %c0_i32_1 = arith.constant 0 : i32
    return %c0_i32, %c0_i32_0 : i32, i32
  }
  func.func @transform_6(%arg0: i32, %arg1: i32) -> (i32, i32) {
    %c0_i32 = arith.constant 0 : i32
    %c0_i32_0 = arith.constant 0 : i32
    return %arg0, %c0_i32 : i32, i32
  }
}

module attributes {stable_mosaic.version = 11 : i64} {
  func.func @_ffn_res_ln_kernel(%arg0: i32, %arg1: i32, %arg2: memref<16x32xbf16, #tpu.memory_space<vmem>>, %arg3: memref<32x128xbf16, #tpu.memory_space<vmem>>, %arg4: memref<1x128xf32, #tpu.memory_space<vmem>>, %arg5: memref<128x32xbf16, #tpu.memory_space<vmem>>, %arg6: memref<1x32xf32, #tpu.memory_space<vmem>>, %arg7: memref<1x32xf32, #tpu.memory_space<vmem>>, %arg8: memref<1x32xf32, #tpu.memory_space<vmem>>, %arg9: memref<16x32xbf16, #tpu.memory_space<vmem>>, %arg10: memref<16x32xf32, #tpu.memory_space<vmem>>) attributes {dimension_semantics = [#tpu.dimension_semantics<parallel>, #tpu.dimension_semantics<arbitrary>], iteration_bounds = array<i64: 1, 1>, scalar_prefetch = 0 : i64, scratch_operands = 1 : i64, tpu.core_type = #tpu.core_type<tc>, window_params = [{transform_indices = @transform_0, window_bounds = array<i64: 16, 32>}, {transform_indices = @transform_1, window_bounds = array<i64: 32, 128>}, {transform_indices = @transform_2, window_bounds = array<i64: 1, 128>}, {transform_indices = @transform_3, window_bounds = array<i64: 128, 32>}, {pipeline_mode = #tpu.pipeline_mode<synchronous>, transform_indices = @transform_4, window_bounds = array<i64: 1, 32>}, {pipeline_mode = #tpu.pipeline_mode<synchronous>, transform_indices = @transform_5, window_bounds = array<i64: 1, 32>}, {pipeline_mode = #tpu.pipeline_mode<synchronous>, transform_indices = @transform_6, window_bounds = array<i64: 1, 32>}, {transform_indices = @transform_7, window_bounds = array<i64: 16, 32>}]} {
    %c0_i32 = arith.constant 0 : i32
    %0 = arith.cmpi eq, %arg1, %c0_i32 : i32
    %1 = arith.extui %0 : i1 to i32
    %c0_i32_0 = arith.constant 0 : i32
    %2 = arith.cmpi ne, %1, %c0_i32_0 : i32
    scf.if %2 {
      %cst_16 = arith.constant 0.000000e+00 : f32
      %20 = vector.broadcast %cst_16 : f32 to vector<16x32xf32>
      %c0_17 = arith.constant 0 : index
      %c0_18 = arith.constant 0 : index
      %21 = vector.load %arg10[%c0_17, %c0_18] : memref<16x32xf32, #tpu.memory_space<vmem>>, vector<16x32xf32>
      tpu.vector_store %arg10[%c0_17, %c0_18], %20 {strides = array<i32>} : memref<16x32xf32, #tpu.memory_space<vmem>>, vector<16x32xf32>,
    } else {
    }
    %c0 = arith.constant 0 : index
    %c0_1 = arith.constant 0 : index
    %3 = vector.load %arg2[%c0, %c0_1] : memref<16x32xbf16, #tpu.memory_space<vmem>>, vector<16x32xbf16>
    %c0_2 = arith.constant 0 : index
    %c0_3 = arith.constant 0 : index
    %4 = vector.load %arg3[%c0_2, %c0_3] : memref<32x128xbf16, #tpu.memory_space<vmem>>, vector<32x128xbf16>
    %cst = arith.constant dense<0.000000e+00> : vector<16x128xf32>
    %5 = tpu.matmul %3, %4, %cst {dimension_numbers = #tpu.dot_dimension_numbers<[1], [0], [0], [1], [0, 0, 1, 1], [], []>} : vector<16x32xbf16>, vector<32x128xbf16>, vector<16x128xf32> -> vector<16x128xf32>
    %c0_4 = arith.constant 0 : index
    %c0_5 = arith.constant 0 : index
    %6 = vector.load %arg4[%c0_4, %c0_5] : memref<1x128xf32, #tpu.memory_space<vmem>>, vector<1x128xf32>
    %7 = vector.broadcast %6 : vector<1x128xf32> to vector<16x128xf32>
    %8 = arith.addf %5, %7 : vector<16x128xf32>
    %cst_6 = arith.constant 0.000000e+00 : f32
    %9 = vector.broadcast %cst_6 : f32 to vector<16x128xf32>
    %10 = arith.maximumf %8, %9 : vector<16x128xf32>
    %c0_7 = arith.constant 0 : index
    %c0_8 = arith.constant 0 : index
    %11 = vector.load %arg10[%c0_7, %c0_8] : memref<16x32xf32, #tpu.memory_space<vmem>>, vector<16x32xf32>
    %12 = arith.truncf %10 : vector<16x128xf32> to vector<16x128xbf16>
    %c0_9 = arith.constant 0 : index
    %c0_10 = arith.constant 0 : index
    %13 = vector.load %arg5[%c0_9, %c0_10] : memref<128x32xbf16, #tpu.memory_space<vmem>>, vector<128x32xbf16>
    %cst_11 = arith.constant dense<0.000000e+00> : vector<16x32xf32>
    %14 = tpu.matmul %12, %13, %cst_11 {dimension_numbers = #tpu.dot_dimension_numbers<[1], [0], [0], [1], [0, 0, 1, 1], [], []>} : vector<16x128xbf16>, vector<128x32xbf16>, vector<16x32xf32> -> vector<16x32xf32>
    %15 = arith.addf %11, %14 : vector<16x32xf32>
    %c0_12 = arith.constant 0 : index
    %c0_13 = arith.constant 0 : index
    %16 = vector.load %arg10[%c0_12, %c0_13] : memref<16x32xf32, #tpu.memory_space<vmem>>, vector<16x32xf32>
    tpu.vector_store %arg10[%c0_12, %c0_13], %15 {strides = array<i32>} : memref<16x32xf32, #tpu.memory_space<vmem>>, vector<16x32xf32>,
    %c0_i32_14 = arith.constant 0 : i32
    %17 = arith.cmpi eq, %arg1, %c0_i32_14 : i32
    %18 = arith.extui %17 : i1 to i32
    %c0_i32_15 = arith.constant 0 : i32
    %19 = arith.cmpi ne, %18, %c0_i32_15 : i32
    scf.if %19 {
      %c0_16 = arith.constant 0 : index
      %c0_17 = arith.constant 0 : index
      %20 = vector.load %arg10[%c0_16, %c0_17] : memref<16x32xf32, #tpu.memory_space<vmem>>, vector<16x32xf32>
      %c0_18 = arith.constant 0 : index
      %c0_19 = arith.constant 0 : index
      %21 = vector.load %arg6[%c0_18, %c0_19] : memref<1x32xf32, #tpu.memory_space<vmem>>, vector<1x32xf32>
      %22 = vector.broadcast %21 : vector<1x32xf32> to vector<16x32xf32>
      %23 = arith.addf %20, %22 : vector<16x32xf32>
      %24 = arith.extf %3 : vector<16x32xbf16> to vector<16x32xf32>
      %25 = arith.addf %23, %24 : vector<16x32xf32>
      %cst_20 = arith.constant dense<0.000000e+00> : vector<16xf32>
      %26 = vector.multi_reduction <add>, %25, %cst_20 [1] : vector<16x32xf32> to vector<16xf32>
      %27 = vector.shape_cast %26 : vector<16xf32> to vector<16x1xf32>
      %cst_21 = arith.constant 3.200000e+01 : f32
      %28 = vector.broadcast %cst_21 : f32 to vector<16x1xf32>
      %29 = arith.divf %27, %28 : vector<16x1xf32>
      %30 = vector.broadcast %29 : vector<16x1xf32> to vector<16x32xf32>
      %31 = arith.subf %25, %30 : vector<16x32xf32>
      %32 = arith.mulf %31, %31 : vector<16x32xf32>
      %cst_22 = arith.constant dense<0.000000e+00> : vector<16xf32>
      %33 = vector.multi_reduction <add>, %32, %cst_22 [1] : vector<16x32xf32> to vector<16xf32>
      %34 = vector.shape_cast %33 : vector<16xf32> to vector<16x1xf32>
      %cst_23 = arith.constant 3.200000e+01 : f32
      %35 = vector.broadcast %cst_23 : f32 to vector<16x1xf32>
      %36 = arith.divf %34, %35 : vector<16x1xf32>
      %37 = vector.broadcast %29 : vector<16x1xf32> to vector<16x32xf32>
      %38 = arith.subf %25, %37 : vector<16x32xf32>
      %cst_24 = arith.constant 9.99999974E-6 : f32
      %39 = vector.broadcast %cst_24 : f32 to vector<16x1xf32>
      %40 = arith.addf %36, %39 : vector<16x1xf32>
      %41 = math.rsqrt %40 : vector<16x1xf32>
      %42 = vector.broadcast %41 : vector<16x1xf32> to vector<16x32xf32>
      %43 = arith.mulf %38, %42 : vector<16x32xf32>
      %c0_25 = arith.constant 0 : index
      %c0_26 = arith.constant 0 : index
      %44 = vector.load %arg7[%c0_25, %c0_26] : memref<1x32xf32, #tpu.memory_space<vmem>>, vector<1x32xf32>
      %45 = vector.broadcast %44 : vector<1x32xf32> to vector<16x32xf32>
      %46 = arith.mulf %43, %45 : vector<16x32xf32>
      %c0_27 = arith.constant 0 : index
      %c0_28 = arith.constant 0 : index
      %47 = vector.load %arg8[%c0_27, %c0_28] : memref<1x32xf32, #tpu.memory_space<vmem>>, vector<1x32xf32>
      %48 = vector.broadcast %47 : vector<1x32xf32> to vector<16x32xf32>
      %49 = arith.addf %46, %48 : vector<16x32xf32>
      %50 = arith.truncf %49 : vector<16x32xf32> to vector<16x32xbf16>
      %c0_29 = arith.constant 0 : index
      %c0_30 = arith.constant 0 : index
      %51 = vector.load %arg9[%c0_29, %c0_30] : memref<16x32xbf16, #tpu.memory_space<vmem>>, vector<16x32xbf16>
      tpu.vector_store %arg9[%c0_29, %c0_30], %50 {strides = array<i32>} : memref<16x32xbf16, #tpu.memory_space<vmem>>, vector<16x32xbf16>,
    } else {
    }
    return
  }
  func.func @transform_0(%arg0: i32, %arg1: i32) -> (i32, i32) {
    %c0_i32 = arith.constant 0 : i32
    %c0_i32_0 = arith.constant 0 : i32
    return %arg0, %c0_i32 : i32, i32
  }
  func.func @transform_1(%arg0: i32, %arg1: i32) -> (i32, i32) {
    %c0_i32 = arith.constant 0 : i32
    %c0_i32_0 = arith.constant 0 : i32
    return %c0_i32, %arg1 : i32, i32
  }
  func.func @transform_2(%arg0: i32, %arg1: i32) -> (i32, i32) {
    %c0_i32 = arith.constant 0 : i32
    %c0_i32_0 = arith.constant 0 : i32
    return %c0_i32, %arg1 : i32, i32
  }
  func.func @transform_3(%arg0: i32, %arg1: i32) -> (i32, i32) {
    %c0_i32 = arith.constant 0 : i32
    %c0_i32_0 = arith.constant 0 : i32
    return %arg1, %c0_i32 : i32, i32
  }
  func.func @transform_4(%arg0: i32, %arg1: i32) -> (i32, i32) {
    %c0_i32 = arith.constant 0 : i32
    %c0_i32_0 = arith.constant 0 : i32
    %c0_i32_1 = arith.constant 0 : i32
    return %c0_i32, %c0_i32_0 : i32, i32
  }
  func.func @transform_5(%arg0: i32, %arg1: i32) -> (i32, i32) {
    %c0_i32 = arith.constant 0 : i32
    %c0_i32_0 = arith.constant 0 : i32
    %c0_i32_1 = arith.constant 0 : i32
    return %c0_i32, %c0_i32_0 : i32, i32
  }
  func.func @transform_6(%arg0: i32, %arg1: i32) -> (i32, i32) {
    %c0_i32 = arith.constant 0 : i32
    %c0_i32_0 = arith.constant 0 : i32
    %c0_i32_1 = arith.constant 0 : i32
    return %c0_i32, %c0_i32_0 : i32, i32
  }
  func.func @transform_7(%arg0: i32, %arg1: i32) -> (i32, i32) {
    %c0_i32 = arith.constant 0 : i32
    %c0_i32_0 = arith.constant 0 : i32
    return %arg0, %c0_i32 : i32, i32
  }
}

</mosaic_0001>

<llo_original>
// kernel: transformer_encoder.9
$region0: #{transformer_encoder.9}
  #allocation0 [shape = 'u32[]', space=smem, size = 0x4, offset = 0x4, fixed_abs, tag = 'smem constant byte address 0x4 - core index']
  #allocation1 [shape = 'u32[144,128]{1,0:T(1,128)}', space=vmem, size = 0x12000, scoped, tag = 'internal scratch']
  %s0 = inlined_call_operand.vmem [shape: bf16[16,16], index: 0, kind: input, shape index: {}]
  %s1 = inlined_call_operand.vmem [shape: bf16[16,32], index: 1, kind: input, shape index: {}]
  %s2 = inlined_call_operand.vmem [shape: f32[1,32], index: 2, kind: input, shape index: {}]
  %s3 = inlined_call_operand.vmem [shape: bf16[16,32], index: 3, kind: output, shape index: {}]
  %s4 = sld [smem:[#allocation0]]
  $region22: #{transformer_encoder.9} parent=0
    _
  %s6 = ssub.s32 1, %s4
  %s7 = scalar_select 0, %s6, %s4
  // Predicated region
  $region2: #{transformer_encoder.9} parent=0 // pred_check
    _
  $region3: #{transformer_encoder.9} parent=0 // pred_check_branch
    %9 = sbr.rel (0) target = $region5
  $region4: #{transformer_encoder.9} parent=0 // pred_region
    _
  $region5: #{transformer_encoder.9} parent=0 // pred_fallthru
    _
  // Predicated region
  $region6: #{transformer_encoder.9} parent=0 // pred_check
    _
  $region7: #{transformer_encoder.9} parent=0 // pred_check_branch
    %11 = sbr.rel (0) target = $region9
  $region8: #{transformer_encoder.9} parent=0 // pred_region
    _
  $region9: #{transformer_encoder.9} parent=0 // pred_fallthru
    _
  // Predicated region
  $region10: #{transformer_encoder.9} parent=0 // pred_check
    _
  $region11: #{transformer_encoder.9} parent=0 // pred_check_branch
    %13 = sbr.rel (0) target = $region13
  $region12: #{transformer_encoder.9} parent=0 // pred_region
    _
  $region13: #{transformer_encoder.9} parent=0 // pred_fallthru
    _
  %v15 = vld [vmem:[%s0] sm:$0xf]
  %v16 = vld [vmem:[%s0 + $0x4] sm:$0xf]
  %v17 = vld [vmem:[%s1] sm:$0xf]
  %v18 = vld [vmem:[%s1 + $0x4] sm:$0xf]
  %v19 = vld [vmem:[%s2] sm:$0x1]
  %v21 = vlaneseq
  %v22 = vshrl.u32 %v21, 7
  %v23 = vsub.s32 0, %v22
  %v24 = vrot.slane %v19, %v23
  %v28 = vunpack.c.l.b16 %v15
  %v29 = vunpack.c.l.b16 %v16
  %v30 = vpack.c.b16 %v29, %v28
  %v33 = vunpack.c.l.b16 %v17
  %v34 = vunpack.c.l.b16 %v18
  %v35 = vpack.c.b16 %v34, %v33
  %vm37 = vcmask 130048
  %v39 = vsel %vm37, %v30, 0
  %41 = vmatprep.subr.bf16.mxu0 0
  %42 = vmatpush1.bf16.msra.mxu0 0
  %43 = vmatprep.subr.bf16.mxu0 0
  %44 = vmatpush1.bf16.msra.mxu0 0
  %45 = vmatprep.subr.bf16.mxu0 0
  %46 = vmatpush1.bf16.msra.mxu0 0
  %47 = vmatprep.subr.bf16.mxu0 0
  %48 = vmatpush1.bf16.msra.mxu0 0
  %49 = vmatprep.subr.bf16.mxu0 0
  %50 = vmatpush1.bf16.msra.mxu0 0
  %51 = vmatprep.subr.bf16.mxu0 0
  %52 = vmatpush1.bf16.msra.mxu0 0
  %53 = vmatprep.subr.bf16.mxu0 0
  %54 = vmatpush1.bf16.msra.mxu0 0
  %55 = vmatprep.subr.bf16.mxu0 0
  %56 = vmatpush1.bf16.msra.mxu0 %v35
  %57 = vmatprep.subr.bf16.mxu0 0
  %58 = vmatpush2.bf16.msra.mxu0 0
  %59 = vmatprep.subr.bf16.mxu0 0
  %60 = vmatpush2.bf16.msra.mxu0 0
  %61 = vmatprep.subr.bf16.mxu0 0
  %62 = vmatpush2.bf16.msra.mxu0 0
  %63 = vmatprep.subr.bf16.mxu0 0
  %64 = vmatpush2.bf16.msra.mxu0 0
  %65 = vmatprep.subr.bf16.mxu0 0
  %66 = vmatpush2.bf16.msra.mxu0 0
  %67 = vmatprep.subr.bf16.mxu0 0
  %68 = vmatpush2.bf16.msra.mxu0 0
  %69 = vmatprep.subr.bf16.mxu0 0
  %70 = vmatpush2.bf16.msra.mxu0 0
  %71 = vmatprep.subr.bf16.mxu0 0
  %72 = vmatpush2.bf16.msra.mxu0 0
  %73 = vmatprep.mubr.bf16.mxu0 0
  %74 = vmatmul.mubr.bf16.gmra.mxu0 %v39
  %v75 = vpop.f32.mrf.mxu0
  %v76 = vadd.f32 %v24, %v75
  %v77 = vpop.f32.mrf.mxu0
  %v78 = vpop.f32.mrf.mxu0
  %v79 = vadd.f32 %v24, %v78
  %v80 = vpop.f32.mrf.mxu0
  %81 = vdwg.mxu0
  %v82 = vpack.c.bf16 %v79, %v76
  %v84 = vunpack.c.l.b16 %v82
  %v85 = vunpack.c.h.b16 %v82
  %v86 = vpack.c.b16 %v84, %v84
  %v87 = vpack.c.b16 %v85, %v85
  %vm90 = vcmask 257024
  %91 = vst.msk [vmem:[%s3] sm:$0xf] %vm90, %v86
  %92 = vst.msk [vmem:[%s3 + $0x4] sm:$0xf] %vm90, %v87
  // Predicated region
  $region14: #{transformer_encoder.9} parent=0 // pred_check
    _
  $region15: #{transformer_encoder.9} parent=0 // pred_check_branch
    %94 = sbr.rel (0) target = $region17
  $region16: #{transformer_encoder.9} parent=0 // pred_region
    _
  $region17: #{transformer_encoder.9} parent=0 // pred_fallthru
    _
  // Predicated region
  $region18: #{transformer_encoder.9} parent=0 // pred_check
    _
  $region19: #{transformer_encoder.9} parent=0 // pred_check_branch
    %96 = sbr.rel (0) target = $region21
  $region20: #{transformer_encoder.9} parent=0 // pred_region
    _
  $region21: #{transformer_encoder.9} parent=0 // pred_fallthru
    _

// kernel: transformer_encoder.10
$region0: #{transformer_encoder.10}
  #allocation0 [shape = 'u32[]', space=smem, size = 0x4, offset = 0x4, fixed_abs, tag = 'smem constant byte address 0x4 - core index']
  #allocation1 [shape = 'u32[144,128]{1,0:T(1,128)}', space=vmem, size = 0x12000, scoped, tag = 'internal scratch']
  %s0 = inlined_call_operand.vmem [shape: bf16[16,32], index: 0, kind: input, shape index: {}]
  %s1 = inlined_call_operand.vmem [shape: bf16[32,96], index: 1, kind: input, shape index: {}]
  %s2 = inlined_call_operand.vmem [shape: f32[1,96], index: 2, kind: input, shape index: {}]
  %s3 = inlined_call_operand.vmem [shape: bf16[16,96], index: 3, kind: output, shape index: {}]
  %s4 = sld [smem:[#allocation0]]
  $region22: #{transformer_encoder.10} parent=0
    _
  %s6 = ssub.s32 1, %s4
  %s7 = scalar_select 0, %s6, %s4
  // Predicated region
  $region2: #{transformer_encoder.10} parent=0 // pred_check
    _
  $region3: #{transformer_encoder.10} parent=0 // pred_check_branch
    %9 = sbr.rel (0) target = $region5
  $region4: #{transformer_encoder.10} parent=0 // pred_region
    _
  $region5: #{transformer_encoder.10} parent=0 // pred_fallthru
    _
  // Predicated region
  $region6: #{transformer_encoder.10} parent=0 // pred_check
    _
  $region7: #{transformer_encoder.10} parent=0 // pred_check_branch
    %11 = sbr.rel (0) target = $region9
  $region8: #{transformer_encoder.10} parent=0 // pred_region
    _
  $region9: #{transformer_encoder.10} parent=0 // pred_fallthru
    _
  // Predicated region
  $region10: #{transformer_encoder.10} parent=0 // pred_check
    _
  $region11: #{transformer_encoder.10} parent=0 // pred_check_branch
    %13 = sbr.rel (0) target = $region13
  $region12: #{transformer_encoder.10} parent=0 // pred_region
    _
  $region13: #{transformer_encoder.10} parent=0 // pred_fallthru
    _
  %v15 = vld [vmem:[%s0] sm:$0xf]
  %v16 = vld [vmem:[%s0 + $0x4] sm:$0xf]
  %v17 = vld [vmem:[%s1] sm:$0xf]
  %v18 = vld [vmem:[%s1 + $0x4] sm:$0xf]
  %v19 = vld [vmem:[%s1 + $0x8] sm:$0xf]
  %v20 = vld [vmem:[%s1 + $0xc] sm:$0xf]
  %v21 = vld [vmem:[%s2] sm:$0x1]
  %v23 = vlaneseq
  %v24 = vshrl.u32 %v23, 7
  %v25 = vsub.s32 0, %v24
  %v26 = vrot.slane %v21, %v25
  %v30 = vunpack.c.l.b16 %v15
  %v31 = vunpack.c.l.b16 %v16
  %v32 = vpack.c.b16 %v31, %v30
  %v37 = vunpack.c.l.b16 %v17
  %v38 = vunpack.c.l.b16 %v18
  %v39 = vunpack.c.l.b16 %v19
  %v40 = vunpack.c.l.b16 %v20
  %v41 = vpack.c.b16 %v38, %v37
  %v42 = vpack.c.b16 %v40, %v39
  %vm45 = vcmask 261120
  %v47 = vsel %vm45, %v32, 0
  %49 = vmatprep.subr.bf16.mxu0 0
  %50 = vmatpush1.bf16.msra.mxu0 0
  %51 = vmatprep.subr.bf16.mxu0 0
  %52 = vmatpush1.bf16.msra.mxu0 0
  %53 = vmatprep.subr.bf16.mxu0 0
  %54 = vmatpush1.bf16.msra.mxu0 0
  %55 = vmatprep.subr.bf16.mxu0 0
  %56 = vmatpush1.bf16.msra.mxu0 0
  %57 = vmatprep.subr.bf16.mxu0 0
  %58 = vmatpush1.bf16.msra.mxu0 0
  %59 = vmatprep.subr.bf16.mxu0 0
  %60 = vmatpush1.bf16.msra.mxu0 0
  %61 = vmatprep.subr.bf16.mxu0 0
  %62 = vmatpush1.bf16.msra.mxu0 %v42
  %63 = vmatprep.subr.bf16.mxu0 0
  %64 = vmatpush1.bf16.msra.mxu0 %v41
  %65 = vmatprep.subr.bf16.mxu0 0
  %66 = vmatpush2.bf16.msra.mxu0 0
  %67 = vmatprep.subr.bf16.mxu0 0
  %68 = vmatpush2.bf16.msra.mxu0 0
  %69 = vmatprep.subr.bf16.mxu0 0
  %70 = vmatpush2.bf16.msra.mxu0 0
  %71 = vmatprep.subr.bf16.mxu0 0
  %72 = vmatpush2.bf16.msra.mxu0 0
  %73 = vmatprep.subr.bf16.mxu0 0
  %74 = vmatpush2.bf16.msra.mxu0 0
  %75 = vmatprep.subr.bf16.mxu0 0
  %76 = vmatpush2.bf16.msra.mxu0 0
  %77 = vmatprep.subr.bf16.mxu0 0
  %78 = vmatpush2.bf16.msra.mxu0 0
  %79 = vmatprep.subr.bf16.mxu0 0
  %80 = vmatpush2.bf16.msra.mxu0 0
  %81 = vmatprep.mubr.bf16.mxu0 0
  %82 = vmatmul.mubr.bf16.gmra.mxu0 %v47
  %v83 = vpop.f32.mrf.mxu0
  %v84 = vadd.f32 %v26, %v83
  %v85 = vpop.f32.mrf.mxu0
  %v86 = vpop.f32.mrf.mxu0
  %v87 = vadd.f32 %v26, %v86
  %v88 = vpop.f32.mrf.mxu0
  %89 = vdwg.mxu0
  %v90 = vpack.c.bf16 %v87, %v84
  %v92 = vunpack.c.l.b16 %v90
  %v93 = vunpack.c.h.b16 %v90
  %v94 = vpack.c.b16 %v92, %v92
  %v95 = vpack.c.b16 %v93, %v93
  %vm98 = vcmask 781312
  %99 = vst.msk [vmem:[%s3] sm:$0xf] %vm98, %v94
  %100 = vst.msk [vmem:[%s3 + $0x4] sm:$0xf] %vm98, %v95
  // Predicated region
  $region14: #{transformer_encoder.10} parent=0 // pred_check
    _
  $region15: #{transformer_encoder.10} parent=0 // pred_check_branch
    %102 = sbr.rel (0) target = $region17
  $region16: #{transformer_encoder.10} parent=0 // pred_region
    _
  $region17: #{transformer_encoder.10} parent=0 // pred_fallthru
    _
  // Predicated region
  $region18: #{transformer_encoder.10} parent=0 // pred_check
    _
  $region19: #{transformer_encoder.10} parent=0 // pred_check_branch
    %104 = sbr.rel (0) target = $region21
  $region20: #{transformer_encoder.10} parent=0 // pred_region
    _
  $region21: #{transformer_encoder.10} parent=0 // pred_fallthru
    _

// kernel: transformer_encoder.11
$region0: #{transformer_encoder.11}
  #allocation0 [shape = 'u32[]', space=smem, size = 0x4, offset = 0x4, fixed_abs, tag = 'smem constant byte address 0x4 - core index']
  #allocation1 [shape = 'u32[144,128]{1,0:T(1,128)}', space=vmem, size = 0x12000, scoped, tag = 'internal scratch']
  %s0 = inlined_call_operand.vmem [shape: bf16[2,8,96], index: 0, kind: input, shape index: {}]
  %s1 = inlined_call_operand.vmem [shape: bf16[2,8,32], index: 1, kind: output, shape index: {}]
  %s2 = sld [smem:[#allocation0]]
  $region37: #{transformer_encoder.11} parent=0
    _
  %s4 = ssub.s32 1, %s2
  %s5 = scalar_select 0, %s4, %s2
  loop: start=0, step=1, limit=4
  $region2: #{transformer_encoder.11} parent=0 // loop_pre_header
    _
  $region3: #{transformer_encoder.11} parent=0 // loop_header
    %s7 = sphi 0, %s11
    %p8 = scmp.ge.s32.totalorder %s7, 4
    %s17 = sphi 0, %s19
    %s20 = sphi 0, %s17
    %s21 = sphi 0, %s20
    %s37 = sphi 0, %s21
    %s43 = sphi 0, %s45
    %s46 = sphi 0, %s43
    %s47 = sphi 0, %s46
    %s63 = sphi 0, %s47
  $region4: #{transformer_encoder.11} parent=0 // loop_header_branch
    %10 = sbr.rel (%p8) target = $region8
  $region5: #{transformer_encoder.11} parent=0 // loop_body
    %s12 = ssub.s32 %s7, 1
    %s13 = ssub.s32 %s7, 2
    %s14 = sadd.s32 %s7, 1
    %s15 = ssub.s32 %s7, %s14
    %p16 = scmp.eq.s32.totalorder %s15, 0
    %s18 = sadd.s32 %s17, 1
    %s19 = scalar_select %p16, %s17, %s18
    %p22 = pneg %p16
    %p23 = scmp.eq.s32.totalorder %s7, 1
    %p24 = por %p22, %p23
    %p25 = scmp.ne.s32.totalorder %s17, %s20
    %p26 = scmp.eq.s32.totalorder %s7, 0
    %p27 = por %p25, %p26
    %p28 = scmp.ne.s32.totalorder %s17, %s20
    %p29 = scmp.eq.s32.totalorder %s12, 1
    %p30 = por %p28, %p29
    %p31 = scmp.ne.s32.totalorder %s20, %s21
    %p32 = scmp.eq.s32.totalorder %s12, 0
    %p33 = por %p31, %p32
    %p34 = scmp.ne.s32.totalorder %s20, %s21
    %p35 = scmp.eq.s32.totalorder %s13, 1
    %p36 = por %p34, %p35
    %p38 = scmp.ne.s32.totalorder %s21, %s37
    %p39 = scmp.eq.s32.totalorder %s13, 0
    %p40 = por %p38, %p39
    %s41 = ssub.s32 %s7, %s14
    %p42 = scmp.eq.s32.totalorder %s41, 0
    %s44 = sadd.s32 %s43, 1
    %s45 = scalar_select %p42, %s43, %s44
    %p48 = pneg %p42
    %p49 = scmp.eq.s32.totalorder %s7, 1
    %p50 = por %p48, %p49
    %p51 = scmp.ne.s32.totalorder %s43, %s46
    %p52 = scmp.eq.s32.totalorder %s7, 0
    %p53 = por %p51, %p52
    %p54 = scmp.ne.s32.totalorder %s43, %s46
    %p55 = scmp.eq.s32.totalorder %s12, 1
    %p56 = por %p54, %p55
    %p57 = scmp.ne.s32.totalorder %s46, %s47
    %p58 = scmp.eq.s32.totalorder %s12, 0
    %p59 = por %p57, %p58
    %p60 = scmp.ne.s32.totalorder %s46, %s47
    %p61 = scmp.eq.s32.totalorder %s13, 1
    %p62 = por %p60, %p61
    %p64 = scmp.ne.s32.totalorder %s47, %s63
    %p65 = scmp.eq.s32.totalorder %s13, 0
    %p66 = por %p64, %p65
    %p67 = scmp.le.s32.totalorder 1, %s7
    %p68 = scmp.lt.s32.totalorder %s7, 3
    %p69 = pnand %p67, %p68
    %p70 = pneg %p69
    // Predicated region
    $region9: #{transformer_encoder.11} parent=5 // pred_check
      _
    $region10: #{transformer_encoder.11} parent=5 // pred_check_branch
      %72 = sbr.rel (%p69) target = $region12
    $region11: #{transformer_encoder.11} parent=5 // pred_region
      %s73 = ssub.s32 %s7, 1
    $region12: #{transformer_encoder.11} parent=5 // pred_fallthru
      _
    %p74 = scmp.lt.s32.totalorder %s7, 2
    // Predicated region
    $region13: #{transformer_encoder.11} parent=5 // pred_check
      %p75 = pneg %p74
    $region14: #{transformer_encoder.11} parent=5 // pred_check_branch
      %77 = sbr.rel (%p75) target = $region16
    $region15: #{transformer_encoder.11} parent=5 // pred_region
      // Predicated region
      $region17: #{transformer_encoder.11} parent=15 // pred_check
        %p78 = pneg %p27
      $region18: #{transformer_encoder.11} parent=15 // pred_check_branch
        %80 = sbr.rel (%p78) target = $region20
      $region19: #{transformer_encoder.11} parent=15 // pred_region
        %p81 = scmp.lt.s32.totalorder %s7, 1
        %s82 = scalar_select %p81, %s7, 1
        %s83 = smul.addr %s82, 4
        %s84 = scalar_lea.vmem %s0, %s83
      $region20: #{transformer_encoder.11} parent=15 // pred_fallthru
        _
    $region16: #{transformer_encoder.11} parent=5 // pred_fallthru
      _
    %p85 = scmp.le.s32.totalorder 1, %s7
    %p86 = scmp.lt.s32.totalorder %s7, 3
    %p87 = pnand %p85, %p86
    %p88 = pneg %p87
    // Predicated region
    $region21: #{transformer_encoder.11} parent=5 // pred_check
      _
    $region22: #{transformer_encoder.11} parent=5 // pred_check_branch
      %90 = sbr.rel (%p87) target = $region24
    $region23: #{transformer_encoder.11} parent=5 // pred_region
      %s91 = ssub.s32 %s7, 1
      %p92 = scmp.lt.s32.totalorder %s12, 1
      %s93 = scalar_select %p92, %s12, 1
      %s94 = smul.addr %s93, 4
      %s95 = scalar_lea.vmem %s0, %s94
      %p96 = pneg %p33
      %p97 = pneg %p30
      %p98 = pneg %p59
      %p99 = pneg %p56
      %p100 = scmp.lt.s32.totalorder %s12, 1
      %s101 = scalar_select %p100, %s12, 1
      %s102 = smul.addr %s101, 4
      %s103 = scalar_lea.vmem %s1, %s102
      %p104 = scmp.lt.s32.totalorder %s12, 1
      %s105 = scalar_select %p104, %s12, 1
      %s106 = smul.addr %s105, 4
      %s107 = scalar_lea.vmem %s0, %s106
      %p108 = scmp.lt.s32.totalorder %s12, 1
      %s109 = scalar_select %p108, %s12, 1
      %s110 = smul.addr %s109, 4
      %s111 = scalar_lea.vmem %s1, %s110
      %v113 = vld [vmem:[%s107] sm:$0xf]
      %v115 = vunpack.c.l.b16 %v113
      %v116 = vpack.c.b16 %v115, %v115
      %117 = vrot.lane.b32.xlu0 %v116, 96
      %v118 = vpop.permute.xlu0 %117
      %vm119 = vcmask 64512
      %v121 = vsel %vm119, %v113, 0
      %v124 = vsel %vm119, %v118, 0
      %126 = vmatprep.subr.bf16.mxu0 0
      %127 = vmatpush1.bf16.xpose.msra.mxu0 0
      %128 = vmatprep.subr.bf16.mxu0 0
      %129 = vmatpush1.bf16.xpose.msra.mxu0 0
      %130 = vmatprep.subr.bf16.mxu0 0
      %131 = vmatpush1.bf16.xpose.msra.mxu0 0
      %132 = vmatprep.subr.bf16.mxu0 0
      %133 = vmatpush1.bf16.xpose.msra.mxu0 0
      %134 = vmatprep.subr.bf16.mxu0 0
      %135 = vmatpush1.bf16.xpose.msra.mxu0 0
      %136 = vmatprep.subr.bf16.mxu0 0
      %137 = vmatpush1.bf16.xpose.msra.mxu0 0
      %138 = vmatprep.subr.bf16.mxu0 0
      %139 = vmatpush1.bf16.xpose.msra.mxu0 0
      %140 = vmatprep.subr.bf16.mxu0 0
      %141 = vmatpush1.bf16.xpose.msra.mxu0 %v124
      %142 = vmatprep.subr.bf16.mxu0 0
      %143 = vmatpush2.bf16.xpose.msra.mxu0 0
      %144 = vmatprep.subr.bf16.mxu0 0
      %145 = vmatpush2.bf16.xpose.msra.mxu0 0
      %146 = vmatprep.subr.bf16.mxu0 0
      %147 = vmatpush2.bf16.xpose.msra.mxu0 0
      %148 = vmatprep.subr.bf16.mxu0 0
      %149 = vmatpush2.bf16.xpose.msra.mxu0 0
      %150 = vmatprep.subr.bf16.mxu0 0
      %151 = vmatpush2.bf16.xpose.msra.mxu0 0
      %152 = vmatprep.subr.bf16.mxu0 0
      %153 = vmatpush2.bf16.xpose.msra.mxu0 0
      %154 = vmatprep.subr.bf16.mxu0 0
      %155 = vmatpush2.bf16.xpose.msra.mxu0 0
      %156 = vmatprep.subr.bf16.mxu0 0
      %157 = vmatpush2.bf16.xpose.msra.mxu0 0
      %158 = vmatprep.mubr.bf16.mxu0 0
      %159 = vmatmul.mubr.bf16.gmra.mxu0 %v121
      %v160 = vpop.f32.mrf.mxu0
      %v161 = vadd.f32 0.0, %v160
      %v162 = vpop.f32.mrf.mxu0
      %v163 = vpop.f32.mrf.mxu0
      %v164 = vpop.f32.mrf.mxu0
      %165 = vdwg.mxu0
      %v166 = vsel %vm119, %v161, -inf
      %167 = vmax.xlane.f32.xlu0 %v166
      %v168 = vpop.xlane.xlu0 %167
      %v169 = vsub.f32 %v161, %v168
      %v170 = vmul.f32 %v169, 1.442695
      %v171 = vpow.pop %v170
      %v172 = vsel %vm119, %v171, 0.0
      %173 = vadd.xlane.f32.xlu0 %v172
      %v174 = vpop.xlane.xlu0 %173
      %v175 = vrcp.pop %v174
      %v176 = vmul.f32 %v171, %v175
      %v177 = vpack.c.bf16 %v176, %v176
      %178 = vrot.lane.b32.xlu0 %v116, 64
      %v179 = vpop.permute.xlu0 %178
      %v181 = vsel %vm119, %v177, 0
      %vm183 = vcmask 1043456
      %v185 = vsel %vm183, %v179, 0
      %187 = vmatprep.subr.bf16.mxu0 0
      %188 = vmatpush1.bf16.msra.mxu0 0
      %189 = vmatprep.subr.bf16.mxu0 0
      %190 = vmatpush1.bf16.msra.mxu0 0
      %191 = vmatprep.subr.bf16.mxu0 0
      %192 = vmatpush1.bf16.msra.mxu0 0
      %193 = vmatprep.subr.bf16.mxu0 0
      %194 = vmatpush1.bf16.msra.mxu0 0
      %195 = vmatprep.subr.bf16.mxu0 0
      %196 = vmatpush1.bf16.msra.mxu0 0
      %197 = vmatprep.subr.bf16.mxu0 0
      %198 = vmatpush1.bf16.msra.mxu0 0
      %199 = vmatprep.subr.bf16.mxu0 0
      %200 = vmatpush1.bf16.msra.mxu0 0
      %201 = vmatprep.subr.bf16.mxu0 0
      %202 = vmatpush1.bf16.msra.mxu0 %v185
      %203 = vmatprep.subr.bf16.mxu0 0
      %204 = vmatpush2.bf16.msra.mxu0 0
      %205 = vmatprep.subr.bf16.mxu0 0
      %206 = vmatpush2.bf16.msra.mxu0 0
      %207 = vmatprep.subr.bf16.mxu0 0
      %208 = vmatpush2.bf16.msra.mxu0 0
      %209 = vmatprep.subr.bf16.mxu0 0
      %210 = vmatpush2.bf16.msra.mxu0 0
      %211 = vmatprep.subr.bf16.mxu0 0
      %212 = vmatpush2.bf16.msra.mxu0 0
      %213 = vmatprep.subr.bf16.mxu0 0
      %214 = vmatpush2.bf16.msra.mxu0 0
      %215 = vmatprep.subr.bf16.mxu0 0
      %216 = vmatpush2.bf16.msra.mxu0 0
      %217 = vmatprep.subr.bf16.mxu0 0
      %218 = vmatpush2.bf16.msra.mxu0 0
      %219 = vmatprep.mubr.bf16.mxu0 0
      %220 = vmatmul.mubr.bf16.gmra.mxu0 %v181
      %v221 = vpop.f32.mrf.mxu0
      %v222 = vadd.f32 0.0, %v221
      %v223 = vpop.f32.mrf.mxu0
      %v224 = vpop.f32.mrf.mxu0
      %v225 = vpop.f32.mrf.mxu0
      %226 = vdwg.mxu0
      %v227 = vpack.c.bf16 %v222, %v222
      %vm228 = vcmask 60416
      %229 = vst.msk [vmem:[%s111] sm:$0xf] %vm228, %v227
      %v230 = vld [vmem:[%s107] sm:$0xf]
      %v232 = vunpack.c.l.b16 %v230
      %v233 = vpack.c.b16 %v232, %v232
      %234 = vrot.lane.b32.xlu0 %v233, 120
      %v235 = vpop.permute.xlu0 %234
      %236 = vrot.lane.b32.xlu0 %v233, 88
      %v237 = vpop.permute.xlu0 %236
      %v239 = vsel %vm119, %v235, 0
      %v242 = vsel %vm119, %v237, 0
      %244 = vmatprep.subr.bf16.mxu0 0
      %245 = vmatpush1.bf16.xpose.msra.mxu0 0
      %246 = vmatprep.subr.bf16.mxu0 0
      %247 = vmatpush1.bf16.xpose.msra.mxu0 0
      %248 = vmatprep.subr.bf16.mxu0 0
      %249 = vmatpush1.bf16.xpose.msra.mxu0 0
      %250 = vmatprep.subr.bf16.mxu0 0
      %251 = vmatpush1.bf16.xpose.msra.mxu0 0
      %252 = vmatprep.subr.bf16.mxu0 0
      %253 = vmatpush1.bf16.xpose.msra.mxu0 0
      %254 = vmatprep.subr.bf16.mxu0 0
      %255 = vmatpush1.bf16.xpose.msra.mxu0 0
      %256 = vmatprep.subr.bf16.mxu0 0
      %257 = vmatpush1.bf16.xpose.msra.mxu0 0
      %258 = vmatprep.subr.bf16.mxu0 0
      %259 = vmatpush1.bf16.xpose.msra.mxu0 %v242
      %260 = vmatprep.subr.bf16.mxu0 0
      %261 = vmatpush2.bf16.xpose.msra.mxu0 0
      %262 = vmatprep.subr.bf16.mxu0 0
      %263 = vmatpush2.bf16.xpose.msra.mxu0 0
      %264 = vmatprep.subr.bf16.mxu0 0
      %265 = vmatpush2.bf16.xpose.msra.mxu0 0
      %266 = vmatprep.subr.bf16.mxu0 0
      %267 = vmatpush2.bf16.xpose.msra.mxu0 0
      %268 = vmatprep.subr.bf16.mxu0 0
      %269 = vmatpush2.bf16.xpose.msra.mxu0 0
      %270 = vmatprep.subr.bf16.mxu0 0
      %271 = vmatpush2.bf16.xpose.msra.mxu0 0
      %272 = vmatprep.subr.bf16.mxu0 0
      %273 = vmatpush2.bf16.xpose.msra.mxu0 0
      %274 = vmatprep.subr.bf16.mxu0 0
      %275 = vmatpush2.bf16.xpose.msra.mxu0 0
      %276 = vmatprep.mubr.bf16.mxu0 0
      %277 = vmatmul.mubr.bf16.gmra.mxu0 %v239
      %v278 = vpop.f32.mrf.mxu0
      %v279 = vadd.f32 0.0, %v278
      %v280 = vpop.f32.mrf.mxu0
      %v281 = vpop.f32.mrf.mxu0
      %v282 = vpop.f32.mrf.mxu0
      %283 = vdwg.mxu0
      %v284 = vsel %vm119, %v279, -inf
      %285 = vmax.xlane.f32.xlu0 %v284
      %v286 = vpop.xlane.xlu0 %285
      %v287 = vsub.f32 %v279, %v286
      %v288 = vmul.f32 %v287, 1.442695
      %v289 = vpow.pop %v288
      %v290 = vsel %vm119, %v289, 0.0
      %291 = vadd.xlane.f32.xlu0 %v290
      %v292 = vpop.xlane.xlu0 %291
      %v293 = vrcp.pop %v292
      %v294 = vmul.f32 %v289, %v293
      %v295 = vpack.c.bf16 %v294, %v294
      %296 = vrot.lane.b32.xlu0 %v233, 56
      %v297 = vpop.permute.xlu0 %296
      %v299 = vsel %vm119, %v295, 0
      %v302 = vsel %vm183, %v297, 0
      %304 = vmatprep.subr.bf16.mxu0 0
      %305 = vmatpush1.bf16.msra.mxu0 0
      %306 = vmatprep.subr.bf16.mxu0 0
      %307 = vmatpush1.bf16.msra.mxu0 0
      %308 = vmatprep.subr.bf16.mxu0 0
      %309 = vmatpush1.bf16.msra.mxu0 0
      %310 = vmatprep.subr.bf16.mxu0 0
      %311 = vmatpush1.bf16.msra.mxu0 0
      %312 = vmatprep.subr.bf16.mxu0 0
      %313 = vmatpush1.bf16.msra.mxu0 0
      %314 = vmatprep.subr.bf16.mxu0 0
      %315 = vmatpush1.bf16.msra.mxu0 0
      %316 = vmatprep.subr.bf16.mxu0 0
      %317 = vmatpush1.bf16.msra.mxu0 0
      %318 = vmatprep.subr.bf16.mxu0 0
      %319 = vmatpush1.bf16.msra.mxu0 %v302
      %320 = vmatprep.subr.bf16.mxu0 0
      %321 = vmatpush2.bf16.msra.mxu0 0
      %322 = vmatprep.subr.bf16.mxu0 0
      %323 = vmatpush2.bf16.msra.mxu0 0
      %324 = vmatprep.subr.bf16.mxu0 0
      %325 = vmatpush2.bf16.msra.mxu0 0
      %326 = vmatprep.subr.bf16.mxu0 0
      %327 = vmatpush2.bf16.msra.mxu0 0
      %328 = vmatprep.subr.bf16.mxu0 0
      %329 = vmatpush2.bf16.msra.mxu0 0
      %330 = vmatprep.subr.bf16.mxu0 0
      %331 = vmatpush2.bf16.msra.mxu0 0
      %332 = vmatprep.subr.bf16.mxu0 0
      %333 = vmatpush2.bf16.msra.mxu0 0
      %334 = vmatprep.subr.bf16.mxu0 0
      %335 = vmatpush2.bf16.msra.mxu0 0
      %336 = vmatprep.mubr.bf16.mxu0 0
      %337 = vmatmul.mubr.bf16.gmra.mxu0 %v299
      %v338 = vpop.f32.mrf.mxu0
      %v339 = vadd.f32 0.0, %v338
      %v340 = vpop.f32.mrf.mxu0
      %v341 = vpop.f32.mrf.mxu0
      %v342 = vpop.f32.mrf.mxu0
      %343 = vdwg.mxu0
      %v344 = vpack.c.bf16 %v339, %v339
      %v346 = vunpack.c.l.b16 %v344
      %v347 = vpack.c.b16 %v346, %v346
      %348 = vrot.lane.b32.xlu0 %v347, 8
      %v349 = vpop.permute.xlu0 %348
      %vm351 = vcmask 126016
      %352 = vst.msk [vmem:[%s111] sm:$0xf] %vm351, %v349
      %v353 = vld [vmem:[%s107] sm:$0xf]
      %v355 = vunpack.c.l.b16 %v353
      %v356 = vpack.c.b16 %v355, %v355
      %357 = vrot.lane.b32.xlu0 %v356, 112
      %v358 = vpop.permute.xlu0 %357
      %359 = vrot.lane.b32.xlu0 %v356, 80
      %v360 = vpop.permute.xlu0 %359
      %v362 = vsel %vm119, %v358, 0
      %v365 = vsel %vm119, %v360, 0
      %367 = vmatprep.subr.bf16.mxu0 0
      %368 = vmatpush1.bf16.xpose.msra.mxu0 0
      %369 = vmatprep.subr.bf16.mxu0 0
      %370 = vmatpush1.bf16.xpose.msra.mxu0 0
      %371 = vmatprep.subr.bf16.mxu0 0
      %372 = vmatpush1.bf16.xpose.msra.mxu0 0
      %373 = vmatprep.subr.bf16.mxu0 0
      %374 = vmatpush1.bf16.xpose.msra.mxu0 0
      %375 = vmatprep.subr.bf16.mxu0 0
      %376 = vmatpush1.bf16.xpose.msra.mxu0 0
      %377 = vmatprep.subr.bf16.mxu0 0
      %378 = vmatpush1.bf16.xpose.msra.mxu0 0
      %379 = vmatprep.subr.bf16.mxu0 0
      %380 = vmatpush1.bf16.xpose.msra.mxu0 0
      %381 = vmatprep.subr.bf16.mxu0 0
      %382 = vmatpush1.bf16.xpose.msra.mxu0 %v365
      %383 = vmatprep.subr.bf16.mxu0 0
      %384 = vmatpush2.bf16.xpose.msra.mxu0 0
      %385 = vmatprep.subr.bf16.mxu0 0
      %386 = vmatpush2.bf16.xpose.msra.mxu0 0
      %387 = vmatprep.subr.bf16.mxu0 0
      %388 = vmatpush2.bf16.xpose.msra.mxu0 0
      %389 = vmatprep.subr.bf16.mxu0 0
      %390 = vmatpush2.bf16.xpose.msra.mxu0 0
      %391 = vmatprep.subr.bf16.mxu0 0
      %392 = vmatpush2.bf16.xpose.msra.mxu0 0
      %393 = vmatprep.subr.bf16.mxu0 0
      %394 = vmatpush2.bf16.xpose.msra.mxu0 0
      %395 = vmatprep.subr.bf16.mxu0 0
      %396 = vmatpush2.bf16.xpose.msra.mxu0 0
      %397 = vmatprep.subr.bf16.mxu0 0
      %398 = vmatpush2.bf16.xpose.msra.mxu0 0
      %399 = vmatprep.mubr.bf16.mxu0 0
      %400 = vmatmul.mubr.bf16.gmra.mxu0 %v362
      %v401 = vpop.f32.mrf.mxu0
      %v402 = vadd.f32 0.0, %v401
      %v403 = vpop.f32.mrf.mxu0
      %v404 = vpop.f32.mrf.mxu0
      %v405 = vpop.f32.mrf.mxu0
      %406 = vdwg.mxu0
      %v407 = vsel %vm119, %v402, -inf
      %408 = vmax.xlane.f32.xlu0 %v407
      %v409 = vpop.xlane.xlu0 %408
      %v410 = vsub.f32 %v402, %v409
      %v411 = vmul.f32 %v410, 1.442695
      %v412 = vpow.pop %v411
      %v413 = vsel %vm119, %v412, 0.0
      %414 = vadd.xlane.f32.xlu0 %v413
      %v415 = vpop.xlane.xlu0 %414
      %v416 = vrcp.pop %v415
      %v417 = vmul.f32 %v412, %v416
      %v418 = vpack.c.bf16 %v417, %v417
      %419 = vrot.lane.b32.xlu0 %v356, 48
      %v420 = vpop.permute.xlu0 %419
      %v422 = vsel %vm119, %v418, 0
      %v425 = vsel %vm183, %v420, 0
      %427 = vmatprep.subr.bf16.mxu0 0
      %428 = vmatpush1.bf16.msra.mxu0 0
      %429 = vmatprep.subr.bf16.mxu0 0
      %430 = vmatpush1.bf16.msra.mxu0 0
      %431 = vmatprep.subr.bf16.mxu0 0
      %432 = vmatpush1.bf16.msra.mxu0 0
      %433 = vmatprep.subr.bf16.mxu0 0
      %434 = vmatpush1.bf16.msra.mxu0 0
      %435 = vmatprep.subr.bf16.mxu0 0
      %436 = vmatpush1.bf16.msra.mxu0 0
      %437 = vmatprep.subr.bf16.mxu0 0
      %438 = vmatpush1.bf16.msra.mxu0 0
      %439 = vmatprep.subr.bf16.mxu0 0
      %440 = vmatpush1.bf16.msra.mxu0 0
      %441 = vmatprep.subr.bf16.mxu0 0
      %442 = vmatpush1.bf16.msra.mxu0 %v425
      %443 = vmatprep.subr.bf16.mxu0 0
      %444 = vmatpush2.bf16.msra.mxu0 0
      %445 = vmatprep.subr.bf16.mxu0 0
      %446 = vmatpush2.bf16.msra.mxu0 0
      %447 = vmatprep.subr.bf16.mxu0 0
      %448 = vmatpush2.bf16.msra.mxu0 0
      %449 = vmatprep.subr.bf16.mxu0 0
      %450 = vmatpush2.bf16.msra.mxu0 0
      %451 = vmatprep.subr.bf16.mxu0 0
      %452 = vmatpush2.bf16.msra.mxu0 0
      %453 = vmatprep.subr.bf16.mxu0 0
      %454 = vmatpush2.bf16.msra.mxu0 0
      %455 = vmatprep.subr.bf16.mxu0 0
      %456 = vmatpush2.bf16.msra.mxu0 0
      %457 = vmatprep.subr.bf16.mxu0 0
      %458 = vmatpush2.bf16.msra.mxu0 0
      %459 = vmatprep.mubr.bf16.mxu0 0
      %460 = vmatmul.mubr.bf16.gmra.mxu0 %v422
      %v461 = vpop.f32.mrf.mxu0
      %v462 = vadd.f32 0.0, %v461
      %v463 = vpop.f32.mrf.mxu0
      %v464 = vpop.f32.mrf.mxu0
      %v465 = vpop.f32.mrf.mxu0
      %466 = vdwg.mxu0
      %v467 = vpack.c.bf16 %v462, %v462
      %v469 = vunpack.c.l.b16 %v467
      %v470 = vpack.c.b16 %v469, %v469
      %471 = vrot.lane.b32.xlu0 %v470, 16
      %v472 = vpop.permute.xlu0 %471
      %vm474 = vcmask 191616
      %475 = vst.msk [vmem:[%s111] sm:$0xf] %vm474, %v472
      %v476 = vld [vmem:[%s107] sm:$0xf]
      %v478 = vunpack.c.l.b16 %v476
      %v479 = vpack.c.b16 %v478, %v478
      %480 = vrot.lane.b32.xlu0 %v479, 104
      %v481 = vpop.permute.xlu0 %480
      %482 = vrot.lane.b32.xlu0 %v479, 72
      %v483 = vpop.permute.xlu0 %482
      %v485 = vsel %vm119, %v481, 0
      %v488 = vsel %vm119, %v483, 0
      %490 = vmatprep.subr.bf16.mxu0 0
      %491 = vmatpush1.bf16.xpose.msra.mxu0 0
      %492 = vmatprep.subr.bf16.mxu0 0
      %493 = vmatpush1.bf16.xpose.msra.mxu0 0
      %494 = vmatprep.subr.bf16.mxu0 0
      %495 = vmatpush1.bf16.xpose.msra.mxu0 0
      %496 = vmatprep.subr.bf16.mxu0 0
      %497 = vmatpush1.bf16.xpose.msra.mxu0 0
      %498 = vmatprep.subr.bf16.mxu0 0
      %499 = vmatpush1.bf16.xpose.msra.mxu0 0
      %500 = vmatprep.subr.bf16.mxu0 0
      %501 = vmatpush1.bf16.xpose.msra.mxu0 0
      %502 = vmatprep.subr.bf16.mxu0 0
      %503 = vmatpush1.bf16.xpose.msra.mxu0 0
      %504 = vmatprep.subr.bf16.mxu0 0
      %505 = vmatpush1.bf16.xpose.msra.mxu0 %v488
      %506 = vmatprep.subr.bf16.mxu0 0
      %507 = vmatpush2.bf16.xpose.msra.mxu0 0
      %508 = vmatprep.subr.bf16.mxu0 0
      %509 = vmatpush2.bf16.xpose.msra.mxu0 0
      %510 = vmatprep.subr.bf16.mxu0 0
      %511 = vmatpush2.bf16.xpose.msra.mxu0 0
      %512 = vmatprep.subr.bf16.mxu0 0
      %513 = vmatpush2.bf16.xpose.msra.mxu0 0
      %514 = vmatprep.subr.bf16.mxu0 0
      %515 = vmatpush2.bf16.xpose.msra.mxu0 0
      %516 = vmatprep.subr.bf16.mxu0 0
      %517 = vmatpush2.bf16.xpose.msra.mxu0 0
      %518 = vmatprep.subr.bf16.mxu0 0
      %519 = vmatpush2.bf16.xpose.msra.mxu0 0
      %520 = vmatprep.subr.bf16.mxu0 0
      %521 = vmatpush2.bf16.xpose.msra.mxu0 0
      %522 = vmatprep.mubr.bf16.mxu0 0
      %523 = vmatmul.mubr.bf16.gmra.mxu0 %v485
      %v524 = vpop.f32.mrf.mxu0
      %v525 = vadd.f32 0.0, %v524
      %v526 = vpop.f32.mrf.mxu0
      %v527 = vpop.f32.mrf.mxu0
      %v528 = vpop.f32.mrf.mxu0
      %529 = vdwg.mxu0
      %v530 = vsel %vm119, %v525, -inf
      %531 = vmax.xlane.f32.xlu0 %v530
      %v532 = vpop.xlane.xlu0 %531
      %v533 = vsub.f32 %v525, %v532
      %v534 = vmul.f32 %v533, 1.442695
      %v535 = vpow.pop %v534
      %v536 = vsel %vm119, %v535, 0.0
      %537 = vadd.xlane.f32.xlu0 %v536
      %v538 = vpop.xlane.xlu0 %537
      %v539 = vrcp.pop %v538
      %v540 = vmul.f32 %v535, %v539
      %v541 = vpack.c.bf16 %v540, %v540
      %542 = vrot.lane.b32.xlu0 %v479, 40
      %v543 = vpop.permute.xlu0 %542
      %v545 = vsel %vm119, %v541, 0
      %v548 = vsel %vm183, %v543, 0
      %550 = vmatprep.subr.bf16.mxu0 0
      %551 = vmatpush1.bf16.msra.mxu0 0
      %552 = vmatprep.subr.bf16.mxu0 0
      %553 = vmatpush1.bf16.msra.mxu0 0
      %554 = vmatprep.subr.bf16.mxu0 0
      %555 = vmatpush1.bf16.msra.mxu0 0
      %556 = vmatprep.subr.bf16.mxu0 0
      %557 = vmatpush1.bf16.msra.mxu0 0
      %558 = vmatprep.subr.bf16.mxu0 0
      %559 = vmatpush1.bf16.msra.mxu0 0
      %560 = vmatprep.subr.bf16.mxu0 0
      %561 = vmatpush1.bf16.msra.mxu0 0
      %562 = vmatprep.subr.bf16.mxu0 0
      %563 = vmatpush1.bf16.msra.mxu0 0
      %564 = vmatprep.subr.bf16.mxu0 0
      %565 = vmatpush1.bf16.msra.mxu0 %v548
      %566 = vmatprep.subr.bf16.mxu0 0
      %567 = vmatpush2.bf16.msra.mxu0 0
      %568 = vmatprep.subr.bf16.mxu0 0
      %569 = vmatpush2.bf16.msra.mxu0 0
      %570 = vmatprep.subr.bf16.mxu0 0
      %571 = vmatpush2.bf16.msra.mxu0 0
      %572 = vmatprep.subr.bf16.mxu0 0
      %573 = vmatpush2.bf16.msra.mxu0 0
      %574 = vmatprep.subr.bf16.mxu0 0
      %575 = vmatpush2.bf16.msra.mxu0 0
      %576 = vmatprep.subr.bf16.mxu0 0
      %577 = vmatpush2.bf16.msra.mxu0 0
      %578 = vmatprep.subr.bf16.mxu0 0
      %579 = vmatpush2.bf16.msra.mxu0 0
      %580 = vmatprep.subr.bf16.mxu0 0
      %581 = vmatpush2.bf16.msra.mxu0 0
      %582 = vmatprep.mubr.bf16.mxu0 0
      %583 = vmatmul.mubr.bf16.gmra.mxu0 %v545
      %v584 = vpop.f32.mrf.mxu0
      %v585 = vadd.f32 0.0, %v584
      %v586 = vpop.f32.mrf.mxu0
      %v587 = vpop.f32.mrf.mxu0
      %v588 = vpop.f32.mrf.mxu0
      %589 = vdwg.mxu0
      %v590 = vpack.c.bf16 %v585, %v585
      %v592 = vunpack.c.l.b16 %v590
      %v593 = vpack.c.b16 %v592, %v592
      %594 = vrot.lane.b32.xlu0 %v593, 24
      %v595 = vpop.permute.xlu0 %594
      %vm597 = vcmask 257216
      %598 = vst.msk [vmem:[%s111] sm:$0xf] %vm597, %v595
      %p599 = scmp.lt.s32.totalorder %s12, 1
      %s600 = scalar_select %p599, %s12, 1
      %s601 = smul.addr %s600, 4
      %s602 = scalar_lea.vmem %s1, %s601
      // Predicated region
      $region25: #{transformer_encoder.11} parent=23 // pred_check
        %p603 = pneg %p56
      $region26: #{transformer_encoder.11} parent=23 // pred_check_branch
        %605 = sbr.rel (%p603) target = $region28
      $region27: #{transformer_encoder.11} parent=23 // pred_region
        _
      $region28: #{transformer_encoder.11} parent=23 // pred_fallthru
        _
    $region24: #{transformer_encoder.11} parent=5 // pred_fallthru
      _
    %p606 = scmp.le.s32.totalorder 2, %s7
    // Predicated region
    $region29: #{transformer_encoder.11} parent=5 // pred_check
      %p607 = pneg %p606
    $region30: #{transformer_encoder.11} parent=5 // pred_check_branch
      %609 = sbr.rel (%p607) target = $region32
    $region31: #{transformer_encoder.11} parent=5 // pred_region
      %s610 = ssub.s32 %s7, 2
      // Predicated region
      $region33: #{transformer_encoder.11} parent=31 // pred_check
        %p611 = pneg %p62
      $region34: #{transformer_encoder.11} parent=31 // pred_check_branch
        %613 = sbr.rel (%p611) target = $region36
      $region35: #{transformer_encoder.11} parent=31 // pred_region
        %p614 = scmp.lt.s32.totalorder %s13, 1
        %s615 = scalar_select %p614, %s13, 1
        %s616 = smul.addr %s615, 4
        %s617 = scalar_lea.vmem %s1, %s616
      $region36: #{transformer_encoder.11} parent=31 // pred_fallthru
        _
    $region32: #{transformer_encoder.11} parent=5 // pred_fallthru
      _
  $region6: #{transformer_encoder.11} parent=0 // loop_footer
    %s11 = sadd.s32 1, %s7
  $region7: #{transformer_encoder.11} parent=0 // loop_footer_branch
    %6 = sbr.rel target = $region3
  $region8: #{transformer_encoder.11} parent=0 // loop_exit
    _

// kernel: transformer_encoder.12
$region0: #{transformer_encoder.12}
  #allocation0 [shape = 'u32[]', space=smem, size = 0x4, offset = 0x4, fixed_abs, tag = 'smem constant byte address 0x4 - core index']
  #allocation1 [shape = 'u32[144,128]{1,0:T(1,128)}', space=vmem, size = 0x12000, scoped, tag = 'internal scratch']
  #allocation2 [shape = 'f32[16,32]{1,0:T(8,128)}', space=vmem, size = 0x2000, scoped, tag = 'scratch operand']
  %s0 = inlined_call_operand.vmem [shape: bf16[16,32], index: 0, kind: input, shape index: {}]
  %s1 = inlined_call_operand.vmem [shape: bf16[32,32], index: 1, kind: input, shape index: {}]
  %s2 = inlined_call_operand.vmem [shape: f32[1,32], index: 2, kind: input, shape index: {}]
  %s3 = inlined_call_operand.vmem [shape: bf16[16,32], index: 3, kind: input, shape index: {}]
  %s4 = inlined_call_operand.vmem [shape: f32[1,32], index: 4, kind: input, shape index: {}]
  %s5 = inlined_call_operand.vmem [shape: f32[1,32], index: 5, kind: input, shape index: {}]
  %s6 = inlined_call_operand.vmem [shape: bf16[16,32], index: 6, kind: output, shape index: {}]
  %s7 = sld [smem:[#allocation0]]
  $region42: #{transformer_encoder.12} parent=0
    _
  %s9 = ssub.s32 1, %s7
  %s10 = scalar_select 0, %s9, %s7
  // Predicated region
  $region2: #{transformer_encoder.12} parent=0 // pred_check
    _
  $region3: #{transformer_encoder.12} parent=0 // pred_check_branch
    %12 = sbr.rel (0) target = $region5
  $region4: #{transformer_encoder.12} parent=0 // pred_region
    _
  $region5: #{transformer_encoder.12} parent=0 // pred_fallthru
    _
  // Predicated region
  $region6: #{transformer_encoder.12} parent=0 // pred_check
    _
  $region7: #{transformer_encoder.12} parent=0 // pred_check_branch
    %14 = sbr.rel (0) target = $region9
  $region8: #{transformer_encoder.12} parent=0 // pred_region
    _
  $region9: #{transformer_encoder.12} parent=0 // pred_fallthru
    _
  // Predicated region
  $region10: #{transformer_encoder.12} parent=0 // pred_check
    _
  $region11: #{transformer_encoder.12} parent=0 // pred_check_branch
    %16 = sbr.rel (0) target = $region13
  $region12: #{transformer_encoder.12} parent=0 // pred_region
    _
  $region13: #{transformer_encoder.12} parent=0 // pred_fallthru
    _
  // Predicated region
  $region14: #{transformer_encoder.12} parent=0 // pred_check
    _
  $region15: #{transformer_encoder.12} parent=0 // pred_check_branch
    %18 = sbr.rel (0) target = $region17
  $region16: #{transformer_encoder.12} parent=0 // pred_region
    _
  $region17: #{transformer_encoder.12} parent=0 // pred_fallthru
    _
  // Predicated region
  $region18: #{transformer_encoder.12} parent=0 // pred_check
    _
  $region19: #{transformer_encoder.12} parent=0 // pred_check_branch
    %20 = sbr.rel (0) target = $region21
  $region20: #{transformer_encoder.12} parent=0 // pred_region
    _
  $region21: #{transformer_encoder.12} parent=0 // pred_fallthru
    _
  // Predicated region
  $region22: #{transformer_encoder.12} parent=0 // pred_check
    _
  $region23: #{transformer_encoder.12} parent=0 // pred_check_branch
    %22 = sbr.rel (0) target = $region25
  $region24: #{transformer_encoder.12} parent=0 // pred_region
    _
  $region25: #{transformer_encoder.12} parent=0 // pred_fallthru
    _
  %p24 = scmp.eq.s32.totalorder 0, 0
  // Predicated region
  $region26: #{transformer_encoder.12} parent=0 // pred_check
    %p25 = pneg %p24
  $region27: #{transformer_encoder.12} parent=0 // pred_check_branch
    %27 = sbr.rel (%p25) target = $region29
  $region28: #{transformer_encoder.12} parent=0 // pred_region
    %vm28 = vcmask 261120
    %29 = vst.msk [vmem:[#allocation2] sm:$0xff] %vm28, 0.0
    %30 = vst.msk [vmem:[#allocation2 + $0x8] sm:$0xff] %vm28, 0.0
  $region29: #{transformer_encoder.12} parent=0 // pred_fallthru
    _
  %v31 = vld [vmem:[#allocation2] sm:$0xff]
  %v32 = vld [vmem:[#allocation2 + $0x8] sm:$0xff]
  %v33 = vld [vmem:[%s0] sm:$0xf]
  %v34 = vld [vmem:[%s0 + $0x4] sm:$0xf]
  %v35 = vld [vmem:[%s1] sm:$0xf]
  %v36 = vld [vmem:[%s1 + $0x4] sm:$0xf]
  %v37 = vld [vmem:[%s1 + $0x8] sm:$0xf]
  %v38 = vld [vmem:[%s1 + $0xc] sm:$0xf]
  %v41 = vunpack.c.l.b16 %v33
  %v42 = vunpack.c.l.b16 %v34
  %v43 = vpack.c.b16 %v42, %v41
  %v48 = vunpack.c.l.b16 %v35
  %v49 = vunpack.c.l.b16 %v36
  %v50 = vunpack.c.l.b16 %v37
  %v51 = vunpack.c.l.b16 %v38
  %v52 = vpack.c.b16 %v49, %v48
  %v53 = vpack.c.b16 %v51, %v50
  %vm56 = vcmask 261120
  %v58 = vsel %vm56, %v43, 0
  %60 = vmatprep.subr.bf16.mxu0 0
  %61 = vmatpush1.bf16.msra.mxu0 0
  %62 = vmatprep.subr.bf16.mxu0 0
  %63 = vmatpush1.bf16.msra.mxu0 0
  %64 = vmatprep.subr.bf16.mxu0 0
  %65 = vmatpush1.bf16.msra.mxu0 0
  %66 = vmatprep.subr.bf16.mxu0 0
  %67 = vmatpush1.bf16.msra.mxu0 0
  %68 = vmatprep.subr.bf16.mxu0 0
  %69 = vmatpush1.bf16.msra.mxu0 0
  %70 = vmatprep.subr.bf16.mxu0 0
  %71 = vmatpush1.bf16.msra.mxu0 0
  %72 = vmatprep.subr.bf16.mxu0 0
  %73 = vmatpush1.bf16.msra.mxu0 %v53
  %74 = vmatprep.subr.bf16.mxu0 0
  %75 = vmatpush1.bf16.msra.mxu0 %v52
  %76 = vmatprep.subr.bf16.mxu0 0
  %77 = vmatpush2.bf16.msra.mxu0 0
  %78 = vmatprep.subr.bf16.mxu0 0
  %79 = vmatpush2.bf16.msra.mxu0 0
  %80 = vmatprep.subr.bf16.mxu0 0
  %81 = vmatpush2.bf16.msra.mxu0 0
  %82 = vmatprep.subr.bf16.mxu0 0
  %83 = vmatpush2.bf16.msra.mxu0 0
  %84 = vmatprep.subr.bf16.mxu0 0
  %85 = vmatpush2.bf16.msra.mxu0 0
  %86 = vmatprep.subr.bf16.mxu0 0
  %87 = vmatpush2.bf16.msra.mxu0 0
  %88 = vmatprep.subr.bf16.mxu0 0
  %89 = vmatpush2.bf16.msra.mxu0 0
  %90 = vmatprep.subr.bf16.mxu0 0
  %91 = vmatpush2.bf16.msra.mxu0 0
  %92 = vmatprep.mubr.bf16.mxu0 0
  %93 = vmatmul.mubr.bf16.gmra.mxu0 %v58
  %v94 = vpop.f32.mrf.mxu0
  %v95 = vadd.f32 0.0, %v94
  %v96 = vpop.f32.mrf.mxu0
  %v97 = vpop.f32.mrf.mxu0
  %v98 = vadd.f32 0.0, %v97
  %v99 = vpop.f32.mrf.mxu0
  %100 = vdwg.mxu0
  %v101 = vadd.f32 %v31, %v95
  %v102 = vadd.f32 %v32, %v98
  %103 = vst.msk [vmem:[#allocation2] sm:$0xff] %vm56, %v101
  %104 = vst.msk [vmem:[#allocation2 + $0x8] sm:$0xff] %vm56, %v102
  // Predicated region
  $region30: #{transformer_encoder.12} parent=0 // pred_check
    %p105 = pneg %p24
  $region31: #{transformer_encoder.12} parent=0 // pred_check_branch
    %107 = sbr.rel (%p105) target = $region33
  $region32: #{transformer_encoder.12} parent=0 // pred_region
    %v108 = vld [vmem:[#allocation2] sm:$0xff]
    %v109 = vld [vmem:[#allocation2 + $0x8] sm:$0xff]
    %v110 = vld [vmem:[%s2] sm:$0x1]
    %v112 = vlaneseq
    %v113 = vshrl.u32 %v112, 7
    %v114 = vsub.s32 0, %v113
    %v115 = vrot.slane %v110, %v114
    %v117 = vadd.f32 %v108, %v115
    %v118 = vadd.f32 %v109, %v115
    %v119 = vld [vmem:[%s3] sm:$0xf]
    %v120 = vld [vmem:[%s3 + $0x4] sm:$0xf]
    %v121 = vunpack.c.l.bf16 %v119
    %v122 = vunpack.c.l.bf16 %v120
    %v123 = vadd.f32 %v117, %v121
    %v124 = vadd.f32 %v118, %v122
    %v125 = vsel %vm56, %v123, 0.0
    %126 = vadd.xlane.f32.xlu0 %v125
    %v127 = vpop.xlane.xlu0 %126
    %v128 = vsel %vm56, %v124, 0.0
    %129 = vadd.xlane.f32.xlu0 %v128
    %v130 = vpop.xlane.xlu0 %129
    %v131 = vrcp.pop 32.0
    %v132 = vmul.f32 %v127, %v131
    %v133 = vmul.f32 %v130, %v131
    %v134 = vsub.f32 %v123, %v132
    %v135 = vsub.f32 %v124, %v133
    %v136 = vmul.f32 %v134, %v134
    %v137 = vmul.f32 %v135, %v135
    %v138 = vsel %vm56, %v136, 0.0
    %139 = vadd.xlane.f32.xlu0 %v138
    %v140 = vpop.xlane.xlu0 %139
    %v141 = vsel %vm56, %v137, 0.0
    %142 = vadd.xlane.f32.xlu0 %v141
    %v143 = vpop.xlane.xlu0 %142
    %v144 = vmul.f32 %v140, %v131
    %v145 = vmul.f32 %v143, %v131
    %v146 = vadd.f32 %v144, 1e-05
    %v147 = vadd.f32 %v145, 1e-05
    %v148 = vrsqrt.pop %v146
    %v149 = vrsqrt.pop %v147
    %v150 = vmul.f32 %v134, %v148
    %v151 = vmul.f32 %v135, %v149
    %v152 = vld [vmem:[%s4] sm:$0x1]
    %v154 = vlaneseq
    %v155 = vshrl.u32 %v154, 7
    %v156 = vsub.s32 0, %v155
    %v157 = vrot.slane %v152, %v156
    %v159 = vmul.f32 %v150, %v157
    %v160 = vmul.f32 %v151, %v157
    %v161 = vld [vmem:[%s5] sm:$0x1]
    %v163 = vlaneseq
    %v164 = vshrl.u32 %v163, 7
    %v165 = vsub.s32 0, %v164
    %v166 = vrot.slane %v161, %v165
    %v168 = vadd.f32 %v159, %v166
    %v169 = vadd.f32 %v160, %v166
    %v170 = vpack.c.bf16 %v169, %v168
    %v172 = vunpack.c.l.b16 %v170
    %v173 = vunpack.c.h.b16 %v170
    %v174 = vpack.c.b16 %v172, %v172
    %v175 = vpack.c.b16 %v173, %v173
    %vm178 = vcmask 257024
    %179 = vst.msk [vmem:[%s6] sm:$0xf] %vm178, %v174
    %180 = vst.msk [vmem:[%s6 + $0x4] sm:$0xf] %vm178, %v175
  $region33: #{transformer_encoder.12} parent=0 // pred_fallthru
    _
  // Predicated region
  $region34: #{transformer_encoder.12} parent=0 // pred_check
    _
  $region35: #{transformer_encoder.12} parent=0 // pred_check_branch
    %182 = sbr.rel (0) target = $region37
  $region36: #{transformer_encoder.12} parent=0 // pred_region
    _
  $region37: #{transformer_encoder.12} parent=0 // pred_fallthru
    _
  // Predicated region
  $region38: #{transformer_encoder.12} parent=0 // pred_check
    _
  $region39: #{transformer_encoder.12} parent=0 // pred_check_branch
    %184 = sbr.rel (0) target = $region41
  $region40: #{transformer_encoder.12} parent=0 // pred_region
    _
  $region41: #{transformer_encoder.12} parent=0 // pred_fallthru
    _

// kernel: transformer_encoder.13
$region0: #{transformer_encoder.13}
  #allocation0 [shape = 'u32[]', space=smem, size = 0x4, offset = 0x4, fixed_abs, tag = 'smem constant byte address 0x4 - core index']
  #allocation1 [shape = 'u32[144,128]{1,0:T(1,128)}', space=vmem, size = 0x12000, scoped, tag = 'internal scratch']
  #allocation2 [shape = 'f32[16,32]{1,0:T(8,128)}', space=vmem, size = 0x2000, scoped, tag = 'scratch operand']
  %s0 = inlined_call_operand.vmem [shape: bf16[16,32], index: 0, kind: input, shape index: {}]
  %s1 = inlined_call_operand.vmem [shape: bf16[32,128], index: 1, kind: input, shape index: {}]
  %s2 = inlined_call_operand.vmem [shape: f32[1,128], index: 2, kind: input, shape index: {}]
  %s3 = inlined_call_operand.vmem [shape: bf16[128,32], index: 3, kind: input, shape index: {}]
  %s4 = inlined_call_operand.vmem [shape: f32[1,32], index: 4, kind: input, shape index: {}]
  %s5 = inlined_call_operand.vmem [shape: f32[1,32], index: 5, kind: input, shape index: {}]
  %s6 = inlined_call_operand.vmem [shape: f32[1,32], index: 6, kind: input, shape index: {}]
  %s7 = inlined_call_operand.vmem [shape: bf16[16,32], index: 7, kind: output, shape index: {}]
  %s8 = sld [smem:[#allocation0]]
  $region46: #{transformer_encoder.13} parent=0
    _
  %s10 = ssub.s32 1, %s8
  %s11 = scalar_select 0, %s10, %s8
  // Predicated region
  $region2: #{transformer_encoder.13} parent=0 // pred_check
    _
  $region3: #{transformer_encoder.13} parent=0 // pred_check_branch
    %13 = sbr.rel (0) target = $region5
  $region4: #{transformer_encoder.13} parent=0 // pred_region
    _
  $region5: #{transformer_encoder.13} parent=0 // pred_fallthru
    _
  // Predicated region
  $region6: #{transformer_encoder.13} parent=0 // pred_check
    _
  $region7: #{transformer_encoder.13} parent=0 // pred_check_branch
    %15 = sbr.rel (0) target = $region9
  $region8: #{transformer_encoder.13} parent=0 // pred_region
    _
  $region9: #{transformer_encoder.13} parent=0 // pred_fallthru
    _
  // Predicated region
  $region10: #{transformer_encoder.13} parent=0 // pred_check
    _
  $region11: #{transformer_encoder.13} parent=0 // pred_check_branch
    %17 = sbr.rel (0) target = $region13
  $region12: #{transformer_encoder.13} parent=0 // pred_region
    _
  $region13: #{transformer_encoder.13} parent=0 // pred_fallthru
    _
  // Predicated region
  $region14: #{transformer_encoder.13} parent=0 // pred_check
    _
  $region15: #{transformer_encoder.13} parent=0 // pred_check_branch
    %19 = sbr.rel (0) target = $region17
  $region16: #{transformer_encoder.13} parent=0 // pred_region
    _
  $region17: #{transformer_encoder.13} parent=0 // pred_fallthru
    _
  // Predicated region
  $region18: #{transformer_encoder.13} parent=0 // pred_check
    _
  $region19: #{transformer_encoder.13} parent=0 // pred_check_branch
    %21 = sbr.rel (0) target = $region21
  $region20: #{transformer_encoder.13} parent=0 // pred_region
    _
  $region21: #{transformer_encoder.13} parent=0 // pred_fallthru
    _
  // Predicated region
  $region22: #{transformer_encoder.13} parent=0 // pred_check
    _
  $region23: #{transformer_encoder.13} parent=0 // pred_check_branch
    %23 = sbr.rel (0) target = $region25
  $region24: #{transformer_encoder.13} parent=0 // pred_region
    _
  $region25: #{transformer_encoder.13} parent=0 // pred_fallthru
    _
  // Predicated region
  $region26: #{transformer_encoder.13} parent=0 // pred_check
    _
  $region27: #{transformer_encoder.13} parent=0 // pred_check_branch
    %25 = sbr.rel (0) target = $region29
  $region28: #{transformer_encoder.13} parent=0 // pred_region
    _
  $region29: #{transformer_encoder.13} parent=0 // pred_fallthru
    _
  %p27 = scmp.eq.s32.totalorder 0, 0
  // Predicated region
  $region30: #{transformer_encoder.13} parent=0 // pred_check
    %p28 = pneg %p27
  $region31: #{transformer_encoder.13} parent=0 // pred_check_branch
    %30 = sbr.rel (%p28) target = $region33
  $region32: #{transformer_encoder.13} parent=0 // pred_region
    %vm31 = vcmask 261120
    %32 = vst.msk [vmem:[#allocation2] sm:$0xff] %vm31, 0.0
    %33 = vst.msk [vmem:[#allocation2 + $0x8] sm:$0xff] %vm31, 0.0
  $region33: #{transformer_encoder.13} parent=0 // pred_fallthru
    _
  %v34 = vld [vmem:[%s0] sm:$0xf]
  %v35 = vld [vmem:[%s0 + $0x4] sm:$0xf]
  %v36 = vld [vmem:[%s1] sm:$0xf]
  %v37 = vld [vmem:[%s1 + $0x4] sm:$0xf]
  %v38 = vld [vmem:[%s1 + $0x8] sm:$0xf]
  %v39 = vld [vmem:[%s1 + $0xc] sm:$0xf]
  %v40 = vld [vmem:[%s2] sm:$0x1]
  %v42 = vlaneseq
  %v43 = vshrl.u32 %v42, 7
  %v44 = vsub.s32 0, %v43
  %v45 = vrot.slane %v40, %v44
  %v49 = vunpack.c.l.b16 %v34
  %v50 = vunpack.c.l.b16 %v35
  %v51 = vpack.c.b16 %v50, %v49
  %v56 = vunpack.c.l.b16 %v36
  %v57 = vunpack.c.l.b16 %v37
  %v58 = vunpack.c.l.b16 %v38
  %v59 = vunpack.c.l.b16 %v39
  %v60 = vpack.c.b16 %v57, %v56
  %v61 = vpack.c.b16 %v59, %v58
  %vm64 = vcmask 261120
  %v66 = vsel %vm64, %v51, 0
  %68 = vmatprep.subr.bf16.mxu0 0
  %69 = vmatpush1.bf16.msra.mxu0 0
  %70 = vmatprep.subr.bf16.mxu0 0
  %71 = vmatpush1.bf16.msra.mxu0 0
  %72 = vmatprep.subr.bf16.mxu0 0
  %73 = vmatpush1.bf16.msra.mxu0 0
  %74 = vmatprep.subr.bf16.mxu0 0
  %75 = vmatpush1.bf16.msra.mxu0 0
  %76 = vmatprep.subr.bf16.mxu0 0
  %77 = vmatpush1.bf16.msra.mxu0 0
  %78 = vmatprep.subr.bf16.mxu0 0
  %79 = vmatpush1.bf16.msra.mxu0 0
  %80 = vmatprep.subr.bf16.mxu0 0
  %81 = vmatpush1.bf16.msra.mxu0 %v61
  %82 = vmatprep.subr.bf16.mxu0 0
  %83 = vmatpush1.bf16.msra.mxu0 %v60
  %84 = vmatprep.subr.bf16.mxu0 0
  %85 = vmatpush2.bf16.msra.mxu0 0
  %86 = vmatprep.subr.bf16.mxu0 0
  %87 = vmatpush2.bf16.msra.mxu0 0
  %88 = vmatprep.subr.bf16.mxu0 0
  %89 = vmatpush2.bf16.msra.mxu0 0
  %90 = vmatprep.subr.bf16.mxu0 0
  %91 = vmatpush2.bf16.msra.mxu0 0
  %92 = vmatprep.subr.bf16.mxu0 0
  %93 = vmatpush2.bf16.msra.mxu0 0
  %94 = vmatprep.subr.bf16.mxu0 0
  %95 = vmatpush2.bf16.msra.mxu0 0
  %96 = vmatprep.subr.bf16.mxu0 0
  %97 = vmatpush2.bf16.msra.mxu0 0
  %98 = vmatprep.subr.bf16.mxu0 0
  %99 = vmatpush2.bf16.msra.mxu0 0
  %100 = vmatprep.mubr.bf16.mxu0 0
  %101 = vmatmul.mubr.bf16.gmra.mxu0 %v66
  %v102 = vpop.f32.mrf.mxu0
  %v103 = vadd.f32 %v45, %v102
  %v104 = vpop.f32.mrf.mxu0
  %v105 = vpop.f32.mrf.mxu0
  %v106 = vadd.f32 %v45, %v105
  %v107 = vpop.f32.mrf.mxu0
  %108 = vdwg.mxu0
  %v109 = vmax.f32 %v103, 0.0
  %v110 = vmax.f32 %v106, 0.0
  %v111 = vld [vmem:[#allocation2] sm:$0xff]
  %v112 = vld [vmem:[#allocation2 + $0x8] sm:$0xff]
  %v113 = vpack.c.bf16 %v110, %v109
  %v114 = vld [vmem:[%s3] sm:$0xf]
  %v115 = vld [vmem:[%s3 + $0x4] sm:$0xf]
  %v116 = vld [vmem:[%s3 + $0x8] sm:$0xf]
  %v117 = vld [vmem:[%s3 + $0xc] sm:$0xf]
  %v118 = vld [vmem:[%s3 + $0x10] sm:$0xf]
  %v119 = vld [vmem:[%s3 + $0x14] sm:$0xf]
  %v120 = vld [vmem:[%s3 + $0x18] sm:$0xf]
  %v121 = vld [vmem:[%s3 + $0x1c] sm:$0xf]
  %v122 = vld [vmem:[%s3 + $0x20] sm:$0xf]
  %v123 = vld [vmem:[%s3 + $0x24] sm:$0xf]
  %v124 = vld [vmem:[%s3 + $0x28] sm:$0xf]
  %v125 = vld [vmem:[%s3 + $0x2c] sm:$0xf]
  %v126 = vld [vmem:[%s3 + $0x30] sm:$0xf]
  %v127 = vld [vmem:[%s3 + $0x34] sm:$0xf]
  %v128 = vld [vmem:[%s3 + $0x38] sm:$0xf]
  %v129 = vld [vmem:[%s3 + $0x3c] sm:$0xf]
  %v146 = vunpack.c.l.b16 %v114
  %v147 = vunpack.c.l.b16 %v115
  %v148 = vunpack.c.l.b16 %v116
  %v149 = vunpack.c.l.b16 %v117
  %v150 = vunpack.c.l.b16 %v118
  %v151 = vunpack.c.l.b16 %v119
  %v152 = vunpack.c.l.b16 %v120
  %v153 = vunpack.c.l.b16 %v121
  %v154 = vunpack.c.l.b16 %v122
  %v155 = vunpack.c.l.b16 %v123
  %v156 = vunpack.c.l.b16 %v124
  %v157 = vunpack.c.l.b16 %v125
  %v158 = vunpack.c.l.b16 %v126
  %v159 = vunpack.c.l.b16 %v127
  %v160 = vunpack.c.l.b16 %v128
  %v161 = vunpack.c.l.b16 %v129
  %v162 = vpack.c.b16 %v147, %v146
  %v163 = vpack.c.b16 %v149, %v148
  %v164 = vpack.c.b16 %v151, %v150
  %v165 = vpack.c.b16 %v153, %v152
  %v166 = vpack.c.b16 %v155, %v154
  %v167 = vpack.c.b16 %v157, %v156
  %v168 = vpack.c.b16 %v159, %v158
  %v169 = vpack.c.b16 %v161, %v160
  %178 = vmatprep.subr.bf16.mxu0 0
  %179 = vmatpush1.bf16.msra.mxu0 %v169
  %180 = vmatprep.subr.bf16.mxu0 0
  %181 = vmatpush1.bf16.msra.mxu0 %v168
  %182 = vmatprep.subr.bf16.mxu0 0
  %183 = vmatpush1.bf16.msra.mxu0 %v167
  %184 = vmatprep.subr.bf16.mxu0 0
  %185 = vmatpush1.bf16.msra.mxu0 %v166
  %186 = vmatprep.subr.bf16.mxu0 0
  %187 = vmatpush1.bf16.msra.mxu0 %v165
  %188 = vmatprep.subr.bf16.mxu0 0
  %189 = vmatpush1.bf16.msra.mxu0 %v164
  %190 = vmatprep.subr.bf16.mxu0 0
  %191 = vmatpush1.bf16.msra.mxu0 %v163
  %192 = vmatprep.subr.bf16.mxu0 0
  %193 = vmatpush1.bf16.msra.mxu0 %v162
  %194 = vmatprep.subr.bf16.mxu0 0
  %195 = vmatpush2.bf16.msra.mxu0 0
  %196 = vmatprep.subr.bf16.mxu0 0
  %197 = vmatpush2.bf16.msra.mxu0 0
  %198 = vmatprep.subr.bf16.mxu0 0
  %199 = vmatpush2.bf16.msra.mxu0 0
  %200 = vmatprep.subr.bf16.mxu0 0
  %201 = vmatpush2.bf16.msra.mxu0 0
  %202 = vmatprep.subr.bf16.mxu0 0
  %203 = vmatpush2.bf16.msra.mxu0 0
  %204 = vmatprep.subr.bf16.mxu0 0
  %205 = vmatpush2.bf16.msra.mxu0 0
  %206 = vmatprep.subr.bf16.mxu0 0
  %207 = vmatpush2.bf16.msra.mxu0 0
  %208 = vmatprep.subr.bf16.mxu0 0
  %209 = vmatpush2.bf16.msra.mxu0 0
  %210 = vmatprep.mubr.bf16.mxu0 0
  %211 = vmatmul.mubr.bf16.gmra.mxu0 %v113
  %v212 = vpop.f32.mrf.mxu0
  %v213 = vadd.f32 0.0, %v212
  %v214 = vpop.f32.mrf.mxu0
  %v215 = vpop.f32.mrf.mxu0
  %v216 = vadd.f32 0.0, %v215
  %v217 = vpop.f32.mrf.mxu0
  %218 = vdwg.mxu0
  %v219 = vadd.f32 %v111, %v213
  %v220 = vadd.f32 %v112, %v216
  %221 = vst.msk [vmem:[#allocation2] sm:$0xff] %vm64, %v219
  %222 = vst.msk [vmem:[#allocation2 + $0x8] sm:$0xff] %vm64, %v220
  // Predicated region
  $region34: #{transformer_encoder.13} parent=0 // pred_check
    %p223 = pneg %p27
  $region35: #{transformer_encoder.13} parent=0 // pred_check_branch
    %225 = sbr.rel (%p223) target = $region37
  $region36: #{transformer_encoder.13} parent=0 // pred_region
    %v226 = vld [vmem:[#allocation2] sm:$0xff]
    %v227 = vld [vmem:[#allocation2 + $0x8] sm:$0xff]
    %v228 = vld [vmem:[%s4] sm:$0x1]
    %v230 = vlaneseq
    %v231 = vshrl.u32 %v230, 7
    %v232 = vsub.s32 0, %v231
    %v233 = vrot.slane %v228, %v232
    %v235 = vadd.f32 %v226, %v233
    %v236 = vadd.f32 %v227, %v233
    %v237 = vunpack.c.l.bf16 %v34
    %v238 = vunpack.c.l.bf16 %v35
    %v239 = vadd.f32 %v235, %v237
    %v240 = vadd.f32 %v236, %v238
    %v241 = vsel %vm64, %v239, 0.0
    %242 = vadd.xlane.f32.xlu0 %v241
    %v243 = vpop.xlane.xlu0 %242
    %v244 = vsel %vm64, %v240, 0.0
    %245 = vadd.xlane.f32.xlu0 %v244
    %v246 = vpop.xlane.xlu0 %245
    %v247 = vrcp.pop 32.0
    %v248 = vmul.f32 %v243, %v247
    %v249 = vmul.f32 %v246, %v247
    %v250 = vsub.f32 %v239, %v248
    %v251 = vsub.f32 %v240, %v249
    %v252 = vmul.f32 %v250, %v250
    %v253 = vmul.f32 %v251, %v251
    %v254 = vsel %vm64, %v252, 0.0
    %255 = vadd.xlane.f32.xlu0 %v254
    %v256 = vpop.xlane.xlu0 %255
    %v257 = vsel %vm64, %v253, 0.0
    %258 = vadd.xlane.f32.xlu0 %v257
    %v259 = vpop.xlane.xlu0 %258
    %v260 = vmul.f32 %v256, %v247
    %v261 = vmul.f32 %v259, %v247
    %v262 = vadd.f32 %v260, 1e-05
    %v263 = vadd.f32 %v261, 1e-05
    %v264 = vrsqrt.pop %v262
    %v265 = vrsqrt.pop %v263
    %v266 = vmul.f32 %v250, %v264
    %v267 = vmul.f32 %v251, %v265
    %v268 = vld [vmem:[%s5] sm:$0x1]
    %v270 = vlaneseq
    %v271 = vshrl.u32 %v270, 7
    %v272 = vsub.s32 0, %v271
    %v273 = vrot.slane %v268, %v272
    %v275 = vmul.f32 %v266, %v273
    %v276 = vmul.f32 %v267, %v273
    %v277 = vld [vmem:[%s6] sm:$0x1]
    %v279 = vlaneseq
    %v280 = vshrl.u32 %v279, 7
    %v281 = vsub.s32 0, %v280
    %v282 = vrot.slane %v277, %v281
    %v284 = vadd.f32 %v275, %v282
    %v285 = vadd.f32 %v276, %v282
    %v286 = vpack.c.bf16 %v285, %v284
    %v288 = vunpack.c.l.b16 %v286
    %v289 = vunpack.c.h.b16 %v286
    %v290 = vpack.c.b16 %v288, %v288
    %v291 = vpack.c.b16 %v289, %v289
    %vm294 = vcmask 257024
    %295 = vst.msk [vmem:[%s7] sm:$0xf] %vm294, %v290
    %296 = vst.msk [vmem:[%s7 + $0x4] sm:$0xf] %vm294, %v291
  $region37: #{transformer_encoder.13} parent=0 // pred_fallthru
    _
  // Predicated region
  $region38: #{transformer_encoder.13} parent=0 // pred_check
    _
  $region39: #{transformer_encoder.13} parent=0 // pred_check_branch
    %298 = sbr.rel (0) target = $region41
  $region40: #{transformer_encoder.13} parent=0 // pred_region
    _
  $region41: #{transformer_encoder.13} parent=0 // pred_fallthru
    _
  // Predicated region
  $region42: #{transformer_encoder.13} parent=0 // pred_check
    _
  $region43: #{transformer_encoder.13} parent=0 // pred_check_branch
    %300 = sbr.rel (0) target = $region45
  $region44: #{transformer_encoder.13} parent=0 // pred_region
    _
  $region45: #{transformer_encoder.13} parent=0 // pred_fallthru
    _

</llo_original>
